<compile_context>
chip_gen: v6e
topology: v6e:2x2x1
jax: 0.10.0
libtpu: 0.0.40
codegen_flags: <defaults>
</compile_context>

<pallas_src>
import functools

import jax
import jax.numpy as jnp
from jax.experimental import pallas as pl
from jax.experimental.pallas import tpu as pltpu

BN_EPS = 1e-5


def _round_up(x, m):
    return (x + m - 1) // m * m


# ------------------------------ Pallas kernels ------------------------------

def _matmul_bn_relu_kernel(a_ref, w_ref, s_ref, b_ref, o_ref):
    # a: (TM, K) bf16, w: (K, Np) bf16, s/b: (1, Np) f32 folded BN params.
    acc = jnp.dot(a_ref[...], w_ref[...], preferred_element_type=jnp.float32)
    out = jnp.maximum(acc * s_ref[...] + b_ref[...], 0.0)
    o_ref[...] = out.astype(o_ref.dtype)


def _conv3x3_bn_relu_kernel(x_ref, w_ref, s_ref, b_ref, o_ref, *,
                            stride, oh, owp):
    """Fused 3x3 conv + BN + ReLU for one image (no HBM im2col).

    stride == 1: x_ref is (1, oh+2, owp+2, cin)  (zero-padded image)
    stride == 2: x_ref is (4, oh+1, owp+1, cin)  (2x2 polyphase of the padded
                 image, so every tap is a unit-stride window)
    w_ref: (9, cin, coutp) bf16; s_ref/b_ref: (1, coutp) f32;
    o_ref: (1, oh, owp, coutp) bf16.  owp is a multiple of 8 so the in-kernel
    (oh, owp, cin) -> (oh*owp, cin) reshape is a pure-layout no-op.
    """
    coutp = o_ref.shape[-1]
    acc = jnp.zeros((oh * owp, coutp), jnp.float32)
    for i in range(3):
        for j in range(3):
            if stride == 1:
                ph, r0, c0 = 0, i, j
            else:
                ph, r0, c0 = (i % 2) * 2 + (j % 2), i // 2, j // 2
            win = x_ref[ph, r0:r0 + oh, c0:c0 + owp, :]        # (oh, owp, cin)
            acc = acc + jnp.dot(win.reshape(oh * owp, win.shape[-1]),
                                w_ref[i * 3 + j],
                                preferred_element_type=jnp.float32)
    out = jnp.maximum(acc * s_ref[...] + b_ref[...], 0.0)
    o_ref[0] = out.reshape(oh, owp, coutp).astype(o_ref.dtype)


def _maxpool3x3s2_kernel(x_ref, o_ref, *, oh, owp):
    # 3x3 / stride-2 max pool as 8 unrolled pairwise maxima (VPU only).
    # x_ref: (4, oh+1, owp+1, C) polyphase (-inf padded); o_ref: (1, oh, owp, C)
    res = None
    for i in range(3):
        for j in range(3):
            ph, r0, c0 = (i % 2) * 2 + (j % 2), i // 2, j // 2
            win = x_ref[ph, r0:r0 + oh, c0:c0 + owp, :]
            res = win if res is None else jnp.maximum(res, win)
    o_ref[0] = res


def _avgpool_fc_kernel(x_ref, w_ref, b_ref, o_ref):
    # x: (N, H*W, C) -> global average pool -> FC (Cout padded to 128 lanes).
    pooled = jnp.mean(x_ref[...].astype(jnp.float32), axis=1)        # (N, C)
    logits = jnp.dot(pooled.astype(jnp.bfloat16), w_ref[...],
                     preferred_element_type=jnp.float32) + b_ref[...]
    o_ref[...] = logits


# ------------------------------ wrappers -------------------------------------

def fused_matmul_bn_relu(a, w, scale, shift, tile_m=512):
    """maybe_relu((a @ w) * scale + shift), tiled over rows of a (bf16 MXU)."""
    M, K = a.shape
    Np = w.shape[1]
    TM = min(tile_m, _round_up(M, 8))
    Mp = _round_up(M, TM)
    if Mp != M:
        a = jnp.pad(a, ((0, Mp - M), (0, 0)))
    out = pl.pallas_call(
        _matmul_bn_relu_kernel,
        out_shape=jax.ShapeDtypeStruct((Mp, Np), jnp.bfloat16),
        grid=(Mp // TM,),
        in_specs=[
            pl.BlockSpec((TM, K), lambda i: (i, 0)),
            pl.BlockSpec((K, Np), lambda i: (0, 0)),
            pl.BlockSpec((1, Np), lambda i: (0, 0)),
            pl.BlockSpec((1, Np), lambda i: (0, 0)),
        ],
        out_specs=pl.BlockSpec((TM, Np), lambda i: (i, 0)),
        compiler_params=pltpu.CompilerParams(
            dimension_semantics=("parallel",)),
    )(a, w, scale, shift)
    return out[:M]


def _extract_patches(x, kh, kw, stride, pad):
    """Stem-only im2col (cin=3, tiny): (N,H,W,C) -> (N,OH,OW,kh*kw,C)."""
    N, H, W, C = x.shape
    xp = jnp.pad(x, ((0, 0), (pad, pad), (pad, pad), (0, 0)))
    OH = (H + 2 * pad - kh) // stride + 1
    OW = (W + 2 * pad - kw) // stride + 1
    wins = []
    for i in range(kh):
        for j in range(kw):
            wins.append(xp[:, i:i + stride * OH:stride,
                           j:j + stride * OW:stride, :])
    return jnp.stack(wins, axis=3), (N, OH, OW)


def conv7x7_stem(x, p):
    # The 7x7/s2 stem (cin=3) keeps the im2col path on purpose: K is tiny
    # (147, zero-padded to 256) so the patch tensor is negligible, and the
    # output is lane-dense (Cout padded 64 -> 128).
    N = x.shape[0]
    patches, (_, OH, OW) = _extract_patches(x.astype(jnp.bfloat16), 7, 7, 2, 3)
    K = 7 * 7 * x.shape[-1]
    a = patches.reshape(N * OH * OW, K)
    a = jnp.pad(a, ((0, 0), (0, p["w"].shape[0] - K)))
    out = fused_matmul_bn_relu(a, p["w"], p["scale"], p["shift"])
    return out.reshape(N, OH, OW, p["coutp"])


def _phase_split_s2(x, owp, pad_value):
    """(N,H,W,C) -> (N*4, H//2+1, owp+1, C): 2x2 polyphase split of the pad-1
    image so every 3x3/stride-2 tap is a unit-stride window of one phase."""
    N, H, W, C = x.shape
    # TODO(synk): stride-2 path assumes even spatial sizes (true for this net).
    assert H % 2 == 0 and W % 2 == 0
    xp = jnp.pad(x, ((0, 0), (1, 1), (1, 2 * (owp + 1) - W - 1), (0, 0)),
                 constant_values=pad_value)
    phases = [xp[:, pi::2, pj::2, :] for pi in (0, 1) for pj in (0, 1)]
    ph = jnp.stack(phases, axis=1)                  # (N, 4, H//2+1, owp+1, C)
    return ph.reshape(N * 4, H // 2 + 1, owp + 1, C)


def conv3x3_bn_relu(x, p):
    N, H, W, C = x.shape
    stride = p["stride"]
    OH, OW = (H, W) if stride == 1 else (H // 2, W // 2)
    OWp = _round_up(OW, 8)
    coutp = p["coutp"]
    x = x.astype(jnp.bfloat16)
    if stride == 1:
        xin = jnp.pad(x, ((0, 0), (1, 1), (1, 1 + OWp - W), (0, 0)))
        in_spec = pl.BlockSpec((1, OH + 2, OWp + 2, C), lambda n: (n, 0, 0, 0))
    else:
        xin = _phase_split_s2(x, OWp, 0.0)
        in_spec = pl.BlockSpec((4, OH + 1, OWp + 1, C), lambda n: (n, 0, 0, 0))
    out = pl.pallas_call(
        functools.partial(_conv3x3_bn_relu_kernel,
                          stride=stride, oh=OH, owp=OWp),
        out_shape=jax.ShapeDtypeStruct((N, OH, OWp, coutp), jnp.bfloat16),
        grid=(N,),
        in_specs=[
            in_spec,
            pl.BlockSpec((9, p["w"].shape[1], coutp), lambda n: (0, 0, 0)),
            pl.BlockSpec((1, coutp), lambda n: (0, 0)),
            pl.BlockSpec((1, coutp), lambda n: (0, 0)),
        ],
        out_specs=pl.BlockSpec((1, OH, OWp, coutp), lambda n: (n, 0, 0, 0)),
        compiler_params=pltpu.CompilerParams(
            dimension_semantics=("parallel",)),
    )(xin, p["w"], p["scale"], p["shift"])
    return out[:, :, :OW, :]


def maxpool3x3s2(x):
    N, H, W, C = x.shape
    OH, OW = H // 2, W // 2
    OWp = _round_up(OW, 8)
    xin = _phase_split_s2(x, OWp, -jnp.inf)
    out = pl.pallas_call(
        functools.partial(_maxpool3x3s2_kernel, oh=OH, owp=OWp),
        out_shape=jax.ShapeDtypeStruct((N, OH, OWp, C), x.dtype),
        grid=(N,),
        in_specs=[pl.BlockSpec((4, OH + 1, OWp + 1, C),
                               lambda n: (n, 0, 0, 0))],
        out_specs=pl.BlockSpec((1, OH, OWp, C), lambda n: (n, 0, 0, 0)),
        compiler_params=pltpu.CompilerParams(
            dimension_semantics=("parallel",)),
    )(xin)
    return out[:, :, :OW, :]


def avgpool_fc(x, fc_w, fc_b, num_classes):
    # TODO(synk): grid-less is fine while N*H*W*C stays tiny; tile over N for
    # large batches.
    N, H, W, C = x.shape
    x_flat = x.reshape(N, H * W, C).astype(jnp.bfloat16)
    out = pl.pallas_call(
        _avgpool_fc_kernel,
        out_shape=jax.ShapeDtypeStruct((N, fc_w.shape[1]), jnp.float32),
    )(x_flat, fc_w, fc_b)
    return out[:, :num_classes]


# --------------------------- params & forward --------------------------------

def _conv_bn_params(key, cin, cout, ksize):
    k1, k2, k3, k4, k5 = jax.random.split(key, 5)
    fan_in = cin * ksize * ksize
    w = jax.random.normal(k1, (cout, cin, ksize, ksize), jnp.float32) * \
        (2.0 / fan_in) ** 0.5
    gamma = 1.0 + 0.1 * jax.random.normal(k2, (cout,), jnp.float32)
    beta = 0.1 * jax.random.normal(k3, (cout,), jnp.float32)
    mean = 0.1 * jax.random.normal(k4, (cout,), jnp.float32)
    var = 0.9 + 0.1 * jnp.abs(jax.random.normal(k5, (cout,), jnp.float32))
    return dict(w=w, gamma=gamma, beta=beta, mean=mean, var=var)


def init_params(key, num_classes=2):
    keys = jax.random.split(key, 10)
    params = {}
    params["conv1"] = dict(_conv_bn_params(keys[0], 3, 64, 7), stride=2, pad=3)
    layer_cfg = [
        ("layer1", 64, 64, 1),
        ("layer2", 64, 128, 2),
        ("layer3", 128, 256, 2),
        ("layer4", 256, 512, 2),
    ]
    ki = 1
    for name, cin, cout, stride in layer_cfg:
        params[name] = [
            dict(_conv_bn_params(keys[ki], cin, cout, 3), stride=stride, pad=1),
            dict(_conv_bn_params(keys[ki + 1], cout, cout, 3), stride=1, pad=1),
        ]
        ki += 2
    kw, kb = jax.random.split(keys[9])
    params["fc_w"] = (jax.random.normal(kw, (512, num_classes), jnp.float32)
                      * (1.0 / 512.0) ** 0.5)
    params["fc_b"] = 0.1 * jax.random.normal(kb, (num_classes,), jnp.float32)
    return params


def prepare_params(params, num_classes=2):
    """One-time (hoisted) weight prep: fold BN into scale/shift, transpose to
    matmul layout, zero-pad channels to lane-dense multiples of 128, cast to
    bf16.  Padded output channels carry exact zeros through the whole net."""
    pp = {"num_classes": num_classes}

    p = params["conv1"]
    cout, cin, kh, kw = p["w"].shape
    K = kh * kw * cin
    Kp = _round_up(K, 128)                     # 147 -> 256 (aligned MXU feed)
    coutp = _round_up(cout, 128)               # 64 -> 128 (lane-dense stores)
    w_mat = jnp.transpose(p["w"], (2, 3, 1, 0)).reshape(K, cout)
    w_mat = jnp.pad(w_mat, ((0, Kp - K), (0, coutp - cout))).astype(jnp.bfloat16)
    scale = p["gamma"] / jnp.sqrt(p["var"] + BN_EPS)
    shift = p["beta"] - p["mean"] * scale
    pp["conv1"] = dict(
        w=w_mat, coutp=coutp,
        scale=jnp.pad(scale, (0, coutp - cout)).reshape(1, coutp)
                 .astype(jnp.float32),
        shift=jnp.pad(shift, (0, coutp - cout)).reshape(1, coutp)
                 .astype(jnp.float32))

    cin_carry = coutp                          # channels of incoming activation
    for name in ("layer1", "layer2", "layer3", "layer4"):
        blocks = []
        for blk in params[name]:
            w = blk["w"]
            cout, cin = w.shape[0], w.shape[1]
            coutp = _round_up(cout, 128)
            w9 = jnp.transpose(w, (2, 3, 1, 0)).reshape(9, cin, cout)
            w9 = jnp.pad(w9, ((0, 0), (0, cin_carry - cin), (0, coutp - cout)))
            scale = blk["gamma"] / jnp.sqrt(blk["var"] + BN_EPS)
            shift = blk["beta"] - blk["mean"] * scale
            blocks.append(dict(
                w=w9.astype(jnp.bfloat16), coutp=coutp, stride=blk["stride"],
                scale=jnp.pad(scale, (0, coutp - cout)).reshape(1, coutp)
                         .astype(jnp.float32),
                shift=jnp.pad(shift, (0, coutp - cout)).reshape(1, coutp)
                         .astype(jnp.float32)))
            cin_carry = coutp
        pp[name] = blocks

    ncp = _round_up(num_classes, 128)
    pp["fc_w"] = jnp.pad(params["fc_w"],
                         ((0, 0), (0, ncp - num_classes))).astype(jnp.bfloat16)
    pp["fc_b"] = jnp.pad(params["fc_b"],
                         (0, ncp - num_classes)).reshape(1, ncp) \
                    .astype(jnp.float32)
    return pp


def resnet18_forward(x_nchw, pp):
    x = jnp.transpose(x_nchw, (0, 2, 3, 1)).astype(jnp.float32)  # NCHW -> NHWC
    x = conv7x7_stem(x, pp["conv1"])           # conv1 + bn + relu  (bf16 out)
    x = maxpool3x3s2(x)                        # maxpool 3x3/s2
    for name in ("layer1", "layer2", "layer3", "layer4"):
        for blk in pp[name]:
            x = conv3x3_bn_relu(x, blk)        # fused conv3x3 + bn + relu
    return avgpool_fc(x, pp["fc_w"], pp["fc_b"], pp["num_classes"])


if __name__ == "__main__":
    key = jax.random.PRNGKey(0)
    pkey, xkey = jax.random.split(key)
    raw_params = init_params(pkey, num_classes=2)
    params = prepare_params(raw_params, num_classes=2)
    # Small NCHW input consistent with the module (3 input channels).
    x = jax.random.normal(xkey, (2, 3, 64, 64), jnp.float32)
    out = resnet18_forward(x, params)
    out = jax.block_until_ready(out)
    assert out.shape == (2, 2), out.shape
    assert bool(jnp.all(jnp.isfinite(out)))
    print("KERNEL_OK")
</pallas_src>

<mosaic_0001>
module attributes {stable_mosaic.version = 11 : i64} {
  func.func @_matmul_bn_relu_kernel(%arg0: i32, %arg1: memref<512x256xbf16, #tpu.memory_space<vmem>>, %arg2: memref<256x128xbf16, #tpu.memory_space<vmem>>, %arg3: memref<1x128xf32, #tpu.memory_space<vmem>>, %arg4: memref<1x128xf32, #tpu.memory_space<vmem>>, %arg5: memref<512x128xbf16, #tpu.memory_space<vmem>>) attributes {dimension_semantics = [#tpu.dimension_semantics<parallel>], iteration_bounds = array<i64: 4>, scalar_prefetch = 0 : i64, scratch_operands = 0 : i64, tpu.core_type = #tpu.core_type<tc>, window_params = [{transform_indices = @transform_0, window_bounds = array<i64: 512, 256>}, {pipeline_mode = #tpu.pipeline_mode<synchronous>, transform_indices = @transform_1, window_bounds = array<i64: 256, 128>}, {pipeline_mode = #tpu.pipeline_mode<synchronous>, transform_indices = @transform_2, window_bounds = array<i64: 1, 128>}, {pipeline_mode = #tpu.pipeline_mode<synchronous>, transform_indices = @transform_3, window_bounds = array<i64: 1, 128>}, {transform_indices = @transform_4, window_bounds = array<i64: 512, 128>}]} {
    %c0 = arith.constant 0 : index
    %c0_0 = arith.constant 0 : index
    %0 = vector.load %arg1[%c0, %c0_0] : memref<512x256xbf16, #tpu.memory_space<vmem>>, vector<512x256xbf16>
    %c0_1 = arith.constant 0 : index
    %c0_2 = arith.constant 0 : index
    %1 = vector.load %arg2[%c0_1, %c0_2] : memref<256x128xbf16, #tpu.memory_space<vmem>>, vector<256x128xbf16>
    %cst = arith.constant dense<0.000000e+00> : vector<512x128xf32>
    %2 = tpu.matmul %0, %1, %cst {dimension_numbers = #tpu.dot_dimension_numbers<[1], [0], [0], [1], [0, 0, 1, 1], [], []>} : vector<512x256xbf16>, vector<256x128xbf16>, vector<512x128xf32> -> vector<512x128xf32>
    %c0_3 = arith.constant 0 : index
    %c0_4 = arith.constant 0 : index
    %3 = vector.load %arg3[%c0_3, %c0_4] : memref<1x128xf32, #tpu.memory_space<vmem>>, vector<1x128xf32>
    %4 = vector.broadcast %3 : vector<1x128xf32> to vector<512x128xf32>
    %5 = arith.mulf %2, %4 : vector<512x128xf32>
    %c0_5 = arith.constant 0 : index
    %c0_6 = arith.constant 0 : index
    %6 = vector.load %arg4[%c0_5, %c0_6] : memref<1x128xf32, #tpu.memory_space<vmem>>, vector<1x128xf32>
    %7 = vector.broadcast %6 : vector<1x128xf32> to vector<512x128xf32>
    %8 = arith.addf %5, %7 : vector<512x128xf32>
    %cst_7 = arith.constant 0.000000e+00 : f32
    %9 = vector.broadcast %cst_7 : f32 to vector<512x128xf32>
    %10 = arith.maximumf %8, %9 : vector<512x128xf32>
    %11 = arith.truncf %10 : vector<512x128xf32> to vector<512x128xbf16>
    %c0_8 = arith.constant 0 : index
    %c0_9 = arith.constant 0 : index
    %12 = vector.load %arg5[%c0_8, %c0_9] : memref<512x128xbf16, #tpu.memory_space<vmem>>, vector<512x128xbf16>
    tpu.vector_store %arg5[%c0_8, %c0_9], %11 {strides = array<i32>} : memref<512x128xbf16, #tpu.memory_space<vmem>>, vector<512x128xbf16>,
    return
  }
  func.func @transform_0(%arg0: i32) -> (i32, i32) {
    %c0_i32 = arith.constant 0 : i32
    %c0_i32_0 = arith.constant 0 : i32
    return %arg0, %c0_i32 : i32, i32
  }
  func.func @transform_1(%arg0: i32) -> (i32, i32) {
    %c0_i32 = arith.constant 0 : i32
    %c0_i32_0 = arith.constant 0 : i32
    %c0_i32_1 = arith.constant 0 : i32
    return %c0_i32, %c0_i32_0 : i32, i32
  }
  func.func @transform_2(%arg0: i32) -> (i32, i32) {
    %c0_i32 = arith.constant 0 : i32
    %c0_i32_0 = arith.constant 0 : i32
    %c0_i32_1 = arith.constant 0 : i32
    return %c0_i32, %c0_i32_0 : i32, i32
  }
  func.func @transform_3(%arg0: i32) -> (i32, i32) {
    %c0_i32 = arith.constant 0 : i32
    %c0_i32_0 = arith.constant 0 : i32
    %c0_i32_1 = arith.constant 0 : i32
    return %c0_i32, %c0_i32_0 : i32, i32
  }
  func.func @transform_4(%arg0: i32) -> (i32, i32) {
    %c0_i32 = arith.constant 0 : i32
    %c0_i32_0 = arith.constant 0 : i32
    return %arg0, %c0_i32 : i32, i32
  }
}

</mosaic_0001>

<llo_original>
// kernel: tpu_custom_call.1
$region0: #{tpu_custom_call.1}
  #allocation0 [shape = 'u32[]', space=smem, size = 0x4, offset = 0x4, fixed_abs, tag = 'smem constant byte address 0x4 - core index']
  #allocation1 [shape = 'u32[144,128]{1,0:T(1,128)}', space=vmem, size = 0x12000, scoped, tag = 'internal scratch']
  %s0 = inlined_call_operand.hbm [shape: bf16[2048,256], index: 0, kind: input, shape index: {}]
  %s1 = inlined_call_operand.hbm [shape: bf16[256,128], index: 1, kind: input, shape index: {}]
  %s2 = inlined_call_operand.vmem [shape: f32[1,128], index: 2, kind: input, shape index: {}]
  %s3 = inlined_call_operand.vmem [shape: f32[1,128], index: 3, kind: input, shape index: {}]
  %s4 = inlined_call_operand.hbm [shape: bf16[2048,128], index: 4, kind: output, shape index: {}]
  %s5 = sld [smem:[#allocation0]]
  $region57: #{tpu_custom_call.1} parent=0
    _
  %s7 = ssub.s32 1, %s5
  %s8 = scalar_select 0, %s7, %s5
  $region1: #{tpu_custom_call.1} parent=0
    #allocation2 [shape = 'u8[524288]{0}', space=vmem, size = 0x80000, scoped, tag = 'input window, operand 0']
    #allocation3 [shape = 's32[2]{0}', space=sflag, size = 0x8, scoped, tag = 'scoped memory for tpu_custom_call.1']
    #allocation4 [shape = 's32[2]{0}', space=sflag, size = 0x8, scoped, tag = 'scoped memory for tpu_custom_call.1']
    #allocation5 [shape = 'u8[65536]{0}', space=vmem, size = 0x10000, scoped, tag = 'input window, operand 1, single buffered']
    #allocation6 [shape = 's32[1]{0}', space=sflag, size = 0x4, scoped, tag = 'scoped memory for tpu_custom_call.1']
    #allocation7 [shape = 'u8[262144]{0}', space=vmem, size = 0x40000, scoped, tag = 'output window, operand 0']
    %9 = vsyncpa [#allocation3], 0
    %s10 = scalar_lea.sflag [#allocation3], 1
    %11 = vsyncpa %s10, 0
    %12 = vsyncpa [#allocation6], 0
    %13 = vsyncpa [#allocation4], 0
    %s14 = scalar_lea.sflag [#allocation4], 1
    %15 = vsyncpa %s14, 0
    loop: start=0, step=1, limit=6
    $region2: #{tpu_custom_call.1} parent=1 // loop_pre_header
      _
    $region3: #{tpu_custom_call.1} parent=1 // loop_header
      %s17 = sphi 0, %s21
      %p18 = scmp.ge.s32.totalorder %s17, 6
      %s27 = sphi 0, %s29
      %s30 = sphi 0, %s27
      %s31 = sphi 0, %s30
      %s47 = sphi 0, %s31
      %s51 = sphi 0, %s51
      %s53 = sphi 0, %s51
      %s54 = sphi 0, %s53
      %s68 = sphi 0, %s54
      %s72 = sphi 0, %s72
      %s74 = sphi 0, %s72
      %s75 = sphi 0, %s74
      %s89 = sphi 0, %s75
      %s93 = sphi 0, %s93
      %s95 = sphi 0, %s93
      %s96 = sphi 0, %s95
      %s110 = sphi 0, %s96
      %s116 = sphi 0, %s118
      %s119 = sphi 0, %s116
      %s120 = sphi 0, %s119
      %s136 = sphi 0, %s120
    $region4: #{tpu_custom_call.1} parent=1 // loop_header_branch
      %20 = sbr.rel (%p18) target = $region8
    $region5: #{tpu_custom_call.1} parent=1 // loop_body
      %s22 = ssub.s32 %s17, 1
      %s23 = ssub.s32 %s17, 2
      %s24 = sadd.s32 %s17, 1
      %s25 = ssub.s32 %s17, %s24
      %p26 = scmp.eq.s32.totalorder %s25, 0
      %s28 = sadd.s32 %s27, 1
      %s29 = scalar_select %p26, %s27, %s28
      %p32 = pneg %p26
      %p33 = scmp.eq.s32.totalorder %s17, 3
      %p34 = por %p32, %p33
      %p35 = scmp.ne.s32.totalorder %s27, %s30
      %p36 = scmp.eq.s32.totalorder %s17, 0
      %p37 = por %p35, %p36
      %p38 = scmp.ne.s32.totalorder %s27, %s30
      %p39 = scmp.eq.s32.totalorder %s22, 3
      %p40 = por %p38, %p39
      %p41 = scmp.ne.s32.totalorder %s30, %s31
      %p42 = scmp.eq.s32.totalorder %s22, 0
      %p43 = por %p41, %p42
      %p44 = scmp.ne.s32.totalorder %s30, %s31
      %p45 = scmp.eq.s32.totalorder %s23, 3
      %p46 = por %p44, %p45
      %p48 = scmp.ne.s32.totalorder %s31, %s47
      %p49 = scmp.eq.s32.totalorder %s23, 0
      %p50 = por %p48, %p49
      %s52 = sadd.s32 %s51, 1
      %p55 = scmp.eq.s32.totalorder %s17, 3
      %p56 = scmp.ne.s32.totalorder %s51, %s53
      %p57 = scmp.eq.s32.totalorder %s17, 0
      %p58 = por %p56, %p57
      %p59 = scmp.ne.s32.totalorder %s51, %s53
      %p60 = scmp.eq.s32.totalorder %s22, 3
      %p61 = por %p59, %p60
      %p62 = scmp.ne.s32.totalorder %s53, %s54
      %p63 = scmp.eq.s32.totalorder %s22, 0
      %p64 = por %p62, %p63
      %p65 = scmp.ne.s32.totalorder %s53, %s54
      %p66 = scmp.eq.s32.totalorder %s23, 3
      %p67 = por %p65, %p66
      %p69 = scmp.ne.s32.totalorder %s54, %s68
      %p70 = scmp.eq.s32.totalorder %s23, 0
      %p71 = por %p69, %p70
      %s73 = sadd.s32 %s72, 1
      %p76 = scmp.eq.s32.totalorder %s17, 3
      %p77 = scmp.ne.s32.totalorder %s72, %s74
      %p78 = scmp.eq.s32.totalorder %s17, 0
      %p79 = por %p77, %p78
      %p80 = scmp.ne.s32.totalorder %s72, %s74
      %p81 = scmp.eq.s32.totalorder %s22, 3
      %p82 = por %p80, %p81
      %p83 = scmp.ne.s32.totalorder %s74, %s75
      %p84 = scmp.eq.s32.totalorder %s22, 0
      %p85 = por %p83, %p84
      %p86 = scmp.ne.s32.totalorder %s74, %s75
      %p87 = scmp.eq.s32.totalorder %s23, 3
      %p88 = por %p86, %p87
      %p90 = scmp.ne.s32.totalorder %s75, %s89
      %p91 = scmp.eq.s32.totalorder %s23, 0
      %p92 = por %p90, %p91
      %s94 = sadd.s32 %s93, 1
      %p97 = scmp.eq.s32.totalorder %s17, 3
      %p98 = scmp.ne.s32.totalorder %s93, %s95
      %p99 = scmp.eq.s32.totalorder %s17, 0
      %p100 = por %p98, %p99
      %p101 = scmp.ne.s32.totalorder %s93, %s95
      %p102 = scmp.eq.s32.totalorder %s22, 3
      %p103 = por %p101, %p102
      %p104 = scmp.ne.s32.totalorder %s95, %s96
      %p105 = scmp.eq.s32.totalorder %s22, 0
      %p106 = por %p104, %p105
      %p107 = scmp.ne.s32.totalorder %s95, %s96
      %p108 = scmp.eq.s32.totalorder %s23, 3
      %p109 = por %p107, %p108
      %p111 = scmp.ne.s32.totalorder %s96, %s110
      %p112 = scmp.eq.s32.totalorder %s23, 0
      %p113 = por %p111, %p112
      %s114 = ssub.s32 %s17, %s24
      %p115 = scmp.eq.s32.totalorder %s114, 0
      %s117 = sadd.s32 %s116, 1
      %s118 = scalar_select %p115, %s116, %s117
      %p121 = pneg %p115
      %p122 = scmp.eq.s32.totalorder %s17, 3
      %p123 = por %p121, %p122
      %p124 = scmp.ne.s32.totalorder %s116, %s119
      %p125 = scmp.eq.s32.totalorder %s17, 0
      %p126 = por %p124, %p125
      %p127 = scmp.ne.s32.totalorder %s116, %s119
      %p128 = scmp.eq.s32.totalorder %s22, 3
      %p129 = por %p127, %p128
      %p130 = scmp.ne.s32.totalorder %s119, %s120
      %p131 = scmp.eq.s32.totalorder %s22, 0
      %p132 = por %p130, %p131
      %p133 = scmp.ne.s32.totalorder %s119, %s120
      %p134 = scmp.eq.s32.totalorder %s23, 3
      %p135 = por %p133, %p134
      %p137 = scmp.ne.s32.totalorder %s120, %s136
      %p138 = scmp.eq.s32.totalorder %s23, 0
      %p139 = por %p137, %p138
      %p140 = scmp.le.s32.totalorder 1, %s17
      %p141 = scmp.lt.s32.totalorder %s17, 5
      %p142 = pnand %p140, %p141
      %p143 = pneg %p142
      // Predicated region
      $region9: #{tpu_custom_call.1} parent=5 // pred_check
        _
      $region10: #{tpu_custom_call.1} parent=5 // pred_check_branch
        %145 = sbr.rel (%p142) target = $region12
      $region11: #{tpu_custom_call.1} parent=5 // pred_region
        %s146 = ssub.s32 %s17, 1
        // Predicated region
        $region13: #{tpu_custom_call.1} parent=11 // pred_check
          %p147 = pneg %p64
        $region14: #{tpu_custom_call.1} parent=11 // pred_check_branch
          %149 = sbr.rel (%p147) target = $region16
        $region15: #{tpu_custom_call.1} parent=11 // pred_region
          %s151 = ssub.s32 2048, 2048
          %152 = vsyncadd [#allocation6], %s151
          %s153 = sshll.u32 [#allocation5], 4
          %s154 = int_to_ptr.vmem [resolvable:$true] %s153
          %159 = dma.hbm_to_vmem [thread:$0]  %s1, 2048, %s154, [#allocation6], 64, 64, 4
        $region16: #{tpu_custom_call.1} parent=11 // pred_fallthru
          _
        // Predicated region
        $region17: #{tpu_custom_call.1} parent=11 // pred_check
          %p160 = pneg %p85
        $region18: #{tpu_custom_call.1} parent=11 // pred_check_branch
          %162 = sbr.rel (%p160) target = $region20
        $region19: #{tpu_custom_call.1} parent=11 // pred_region
          _
        $region20: #{tpu_custom_call.1} parent=11 // pred_fallthru
          _
        // Predicated region
        $region21: #{tpu_custom_call.1} parent=11 // pred_check
          %p163 = pneg %p106
        $region22: #{tpu_custom_call.1} parent=11 // pred_check_branch
          %165 = sbr.rel (%p163) target = $region24
        $region23: #{tpu_custom_call.1} parent=11 // pred_region
          _
        $region24: #{tpu_custom_call.1} parent=11 // pred_fallthru
          _
      $region12: #{tpu_custom_call.1} parent=5 // pred_fallthru
        _
      %p166 = scmp.lt.s32.totalorder %s17, 4
      // Predicated region
      $region25: #{tpu_custom_call.1} parent=5 // pred_check
        %p167 = pneg %p166
      $region26: #{tpu_custom_call.1} parent=5 // pred_check_branch
        %169 = sbr.rel (%p167) target = $region28
      $region27: #{tpu_custom_call.1} parent=5 // pred_region
        // Predicated region
        $region29: #{tpu_custom_call.1} parent=27 // pred_check
          %p170 = pneg %p37
        $region30: #{tpu_custom_call.1} parent=27 // pred_check_branch
          %172 = sbr.rel (%p170) target = $region32
        $region31: #{tpu_custom_call.1} parent=27 // pred_region
          %s173 = sand.u32 %s27, 1
          %s174 = scalar_lea.sflag [#allocation3], %s173
          %s175 = sand.u32 %s27, 1
          %s176 = smul.addr %s175, 512
          %s177 = scalar_lea.vmem [#allocation2], %s176
          %s178 = smul.u32 64, %s17
          %s180 = ssub.s32 8192, 8192
          %181 = vsyncadd %s174, %s180
          %s182 = smul.addr %s178, 2
          %s183 = smul.addr %s182, 64
          %s184 = scalar_lea.hbm %s0, %s183
          %s185 = sshll.u32 %s177, 4
          %s186 = int_to_ptr.vmem [resolvable:$true] %s185
          %191 = dma.hbm_to_vmem [thread:$0]  %s184, 8192, %s186, %s174, 128, 128, 8
        $region32: #{tpu_custom_call.1} parent=27 // pred_fallthru
          _
      $region28: #{tpu_custom_call.1} parent=5 // pred_fallthru
        _
      %p192 = scmp.le.s32.totalorder 1, %s17
      %p193 = scmp.lt.s32.totalorder %s17, 5
      %p194 = pnand %p192, %p193
      %p195 = pneg %p194
      // Predicated region
      $region33: #{tpu_custom_call.1} parent=5 // pred_check
        _
      $region34: #{tpu_custom_call.1} parent=5 // pred_check_branch
        %197 = sbr.rel (%p194) target = $region36
      $region35: #{tpu_custom_call.1} parent=5 // pred_region
        %s198 = ssub.s32 %s17, 1
        %s199 = sand.u32 %s30, 1
        %s200 = scalar_lea.sflag [#allocation3], %s199
        %s201 = sand.u32 %s30, 1
        %s202 = smul.addr %s201, 512
        %s203 = scalar_lea.vmem [#allocation2], %s202
        // Predicated region
        $region37: #{tpu_custom_call.1} parent=35 // pred_check
          %p204 = pneg %p43
        $region38: #{tpu_custom_call.1} parent=35 // pred_check_branch
          %206 = sbr.rel (%p204) target = $region40
        $region39: #{tpu_custom_call.1} parent=35 // pred_region
          %207 = dma.done %s200, 8192
        $region40: #{tpu_custom_call.1} parent=35 // pred_fallthru
          _
        // Predicated region
        $region41: #{tpu_custom_call.1} parent=35 // pred_check
          %p208 = pneg %p64
        $region42: #{tpu_custom_call.1} parent=35 // pred_check_branch
          %210 = sbr.rel (%p208) target = $region44
        $region43: #{tpu_custom_call.1} parent=35 // pred_region
          %211 = dma.done [#allocation6], 2048
        $region44: #{tpu_custom_call.1} parent=35 // pred_fallthru
          _
        %s212 = sand.u32 %s30, 1
        %s213 = scalar_lea.sflag [#allocation3], %s212
        %s214 = sand.u32 %s30, 1
        %s215 = smul.addr %s214, 512
        %s216 = scalar_lea.vmem [#allocation2], %s215
        %p217 = pneg %p43
        %p218 = pneg %p40
        %p219 = pneg %p64
        %p220 = pneg %p61
        %p221 = pneg %p85
        %p222 = pneg %p82
        %p223 = pneg %p106
        %p224 = pneg %p103
        %p225 = pneg %p132
        %p226 = pneg %p129
        %s227 = sand.u32 %s119, 1
        %s228 = scalar_lea.sflag [#allocation4], %s227
        %s229 = sand.u32 %s119, 1
        %s230 = smul.addr %s229, 256
        %s231 = scalar_lea.vmem [#allocation7], %s230
        %s232 = smul.u32 64, %s22
        %s233 = smul.u32 64, %s22
        %v235 = vld [vmem:[%s203] sm:$0xff]
        %v236 = vld [vmem:[%s203 + $0x8] sm:$0xff]
        %v237 = vld [vmem:[%s203 + $0x10] sm:$0xff]
        %v238 = vld [vmem:[%s203 + $0x18] sm:$0xff]
        %v239 = vld [vmem:[%s203 + $0x20] sm:$0xff]
        %v240 = vld [vmem:[%s203 + $0x28] sm:$0xff]
        %v241 = vld [vmem:[%s203 + $0x30] sm:$0xff]
        %v242 = vld [vmem:[%s203 + $0x38] sm:$0xff]
        %v243 = vld [vmem:[%s203 + $0x40] sm:$0xff]
        %v244 = vld [vmem:[%s203 + $0x48] sm:$0xff]
        %v245 = vld [vmem:[%s203 + $0x50] sm:$0xff]
        %v246 = vld [vmem:[%s203 + $0x58] sm:$0xff]
        %v247 = vld [vmem:[%s203 + $0x60] sm:$0xff]
        %v248 = vld [vmem:[%s203 + $0x68] sm:$0xff]
        %v249 = vld [vmem:[%s203 + $0x70] sm:$0xff]
        %v250 = vld [vmem:[%s203 + $0x78] sm:$0xff]
        %v251 = vld [vmem:[%s203 + $0x80] sm:$0xff]
        %v252 = vld [vmem:[%s203 + $0x88] sm:$0xff]
        %v253 = vld [vmem:[%s203 + $0x90] sm:$0xff]
        %v254 = vld [vmem:[%s203 + $0x98] sm:$0xff]
        %v255 = vld [vmem:[%s203 + $0xa0] sm:$0xff]
        %v256 = vld [vmem:[%s203 + $0xa8] sm:$0xff]
        %v257 = vld [vmem:[%s203 + $0xb0] sm:$0xff]
        %v258 = vld [vmem:[%s203 + $0xb8] sm:$0xff]
        %v259 = vld [vmem:[%s203 + $0xc0] sm:$0xff]
        %v260 = vld [vmem:[%s203 + $0xc8] sm:$0xff]
        %v261 = vld [vmem:[%s203 + $0xd0] sm:$0xff]
        %v262 = vld [vmem:[%s203 + $0xd8] sm:$0xff]
        %v263 = vld [vmem:[%s203 + $0xe0] sm:$0xff]
        %v264 = vld [vmem:[%s203 + $0xe8] sm:$0xff]
        %v265 = vld [vmem:[%s203 + $0xf0] sm:$0xff]
        %v266 = vld [vmem:[%s203 + $0xf8] sm:$0xff]
        %v267 = vld [vmem:[%s203 + $0x100] sm:$0xff]
        %v268 = vld [vmem:[%s203 + $0x108] sm:$0xff]
        %v269 = vld [vmem:[%s203 + $0x110] sm:$0xff]
        %v270 = vld [vmem:[%s203 + $0x118] sm:$0xff]
        %v271 = vld [vmem:[%s203 + $0x120] sm:$0xff]
        %v272 = vld [vmem:[%s203 + $0x128] sm:$0xff]
        %v273 = vld [vmem:[%s203 + $0x130] sm:$0xff]
        %v274 = vld [vmem:[%s203 + $0x138] sm:$0xff]
        %v275 = vld [vmem:[%s203 + $0x140] sm:$0xff]
        %v276 = vld [vmem:[%s203 + $0x148] sm:$0xff]
        %v277 = vld [vmem:[%s203 + $0x150] sm:$0xff]
        %v278 = vld [vmem:[%s203 + $0x158] sm:$0xff]
        %v279 = vld [vmem:[%s203 + $0x160] sm:$0xff]
        %v280 = vld [vmem:[%s203 + $0x168] sm:$0xff]
        %v281 = vld [vmem:[%s203 + $0x170] sm:$0xff]
        %v282 = vld [vmem:[%s203 + $0x178] sm:$0xff]
        %v283 = vld [vmem:[%s203 + $0x180] sm:$0xff]
        %v284 = vld [vmem:[%s203 + $0x188] sm:$0xff]
        %v285 = vld [vmem:[%s203 + $0x190] sm:$0xff]
        %v286 = vld [vmem:[%s203 + $0x198] sm:$0xff]
        %v287 = vld [vmem:[%s203 + $0x1a0] sm:$0xff]
        %v288 = vld [vmem:[%s203 + $0x1a8] sm:$0xff]
        %v289 = vld [vmem:[%s203 + $0x1b0] sm:$0xff]
        %v290 = vld [vmem:[%s203 + $0x1b8] sm:$0xff]
        %v291 = vld [vmem:[%s203 + $0x1c0] sm:$0xff]
        %v292 = vld [vmem:[%s203 + $0x1c8] sm:$0xff]
        %v293 = vld [vmem:[%s203 + $0x1d0] sm:$0xff]
        %v294 = vld [vmem:[%s203 + $0x1d8] sm:$0xff]
        %v295 = vld [vmem:[%s203 + $0x1e0] sm:$0xff]
        %v296 = vld [vmem:[%s203 + $0x1e8] sm:$0xff]
        %v297 = vld [vmem:[%s203 + $0x1f0] sm:$0xff]
        %v298 = vld [vmem:[%s203 + $0x1f8] sm:$0xff]
        %v299 = vld [vmem:[#allocation5] sm:$0xf]
        %v300 = vld [vmem:[#allocation5 + $0x4] sm:$0xf]
        %v301 = vld [vmem:[#allocation5 + $0x8] sm:$0xf]
        %v302 = vld [vmem:[#allocation5 + $0xc] sm:$0xf]
        %v303 = vld [vmem:[#allocation5 + $0x10] sm:$0xf]
        %v304 = vld [vmem:[#allocation5 + $0x14] sm:$0xf]
        %v305 = vld [vmem:[#allocation5 + $0x18] sm:$0xf]
        %v306 = vld [vmem:[#allocation5 + $0x1c] sm:$0xf]
        %v307 = vld [vmem:[#allocation5 + $0x20] sm:$0xf]
        %v308 = vld [vmem:[#allocation5 + $0x24] sm:$0xf]
        %v309 = vld [vmem:[#allocation5 + $0x28] sm:$0xf]
        %v310 = vld [vmem:[#allocation5 + $0x2c] sm:$0xf]
        %v311 = vld [vmem:[#allocation5 + $0x30] sm:$0xf]
        %v312 = vld [vmem:[#allocation5 + $0x34] sm:$0xf]
        %v313 = vld [vmem:[#allocation5 + $0x38] sm:$0xf]
        %v314 = vld [vmem:[#allocation5 + $0x3c] sm:$0xf]
        %v315 = vld [vmem:[#allocation5 + $0x40] sm:$0xf]
        %v316 = vld [vmem:[#allocation5 + $0x44] sm:$0xf]
        %v317 = vld [vmem:[#allocation5 + $0x48] sm:$0xf]
        %v318 = vld [vmem:[#allocation5 + $0x4c] sm:$0xf]
        %v319 = vld [vmem:[#allocation5 + $0x50] sm:$0xf]
        %v320 = vld [vmem:[#allocation5 + $0x54] sm:$0xf]
        %v321 = vld [vmem:[#allocation5 + $0x58] sm:$0xf]
        %v322 = vld [vmem:[#allocation5 + $0x5c] sm:$0xf]
        %v323 = vld [vmem:[#allocation5 + $0x60] sm:$0xf]
        %v324 = vld [vmem:[#allocation5 + $0x64] sm:$0xf]
        %v325 = vld [vmem:[#allocation5 + $0x68] sm:$0xf]
        %v326 = vld [vmem:[#allocation5 + $0x6c] sm:$0xf]
        %v327 = vld [vmem:[#allocation5 + $0x70] sm:$0xf]
        %v328 = vld [vmem:[#allocation5 + $0x74] sm:$0xf]
        %v329 = vld [vmem:[#allocation5 + $0x78] sm:$0xf]
        %v330 = vld [vmem:[#allocation5 + $0x7c] sm:$0xf]
        %v395 = vunpack.c.l.b16 %v235
        %v396 = vunpack.c.h.b16 %v235
        %v397 = vunpack.c.l.b16 %v236
        %v398 = vunpack.c.h.b16 %v236
        %v399 = vunpack.c.l.b16 %v237
        %v400 = vunpack.c.h.b16 %v237
        %v401 = vunpack.c.l.b16 %v238
        %v402 = vunpack.c.h.b16 %v238
        %v403 = vunpack.c.l.b16 %v239
        %v404 = vunpack.c.h.b16 %v239
        %v405 = vunpack.c.l.b16 %v240
        %v406 = vunpack.c.h.b16 %v240
        %v407 = vunpack.c.l.b16 %v241
        %v408 = vunpack.c.h.b16 %v241
        %v409 = vunpack.c.l.b16 %v242
        %v410 = vunpack.c.h.b16 %v242
        %v411 = vunpack.c.l.b16 %v243
        %v412 = vunpack.c.h.b16 %v243
        %v413 = vunpack.c.l.b16 %v244
        %v414 = vunpack.c.h.b16 %v244
        %v415 = vunpack.c.l.b16 %v245
        %v416 = vunpack.c.h.b16 %v245
        %v417 = vunpack.c.l.b16 %v246
        %v418 = vunpack.c.h.b16 %v246
        %v419 = vunpack.c.l.b16 %v247
        %v420 = vunpack.c.h.b16 %v247
        %v421 = vunpack.c.l.b16 %v248
        %v422 = vunpack.c.h.b16 %v248
        %v423 = vunpack.c.l.b16 %v249
        %v424 = vunpack.c.h.b16 %v249
        %v425 = vunpack.c.l.b16 %v250
        %v426 = vunpack.c.h.b16 %v250
        %v427 = vunpack.c.l.b16 %v251
        %v428 = vunpack.c.h.b16 %v251
        %v429 = vunpack.c.l.b16 %v252
        %v430 = vunpack.c.h.b16 %v252
        %v431 = vunpack.c.l.b16 %v253
        %v432 = vunpack.c.h.b16 %v253
        %v433 = vunpack.c.l.b16 %v254
        %v434 = vunpack.c.h.b16 %v254
        %v435 = vunpack.c.l.b16 %v255
        %v436 = vunpack.c.h.b16 %v255
        %v437 = vunpack.c.l.b16 %v256
        %v438 = vunpack.c.h.b16 %v256
        %v439 = vunpack.c.l.b16 %v257
        %v440 = vunpack.c.h.b16 %v257
        %v441 = vunpack.c.l.b16 %v258
        %v442 = vunpack.c.h.b16 %v258
        %v443 = vunpack.c.l.b16 %v259
        %v444 = vunpack.c.h.b16 %v259
        %v445 = vunpack.c.l.b16 %v260
        %v446 = vunpack.c.h.b16 %v260
        %v447 = vunpack.c.l.b16 %v261
        %v448 = vunpack.c.h.b16 %v261
        %v449 = vunpack.c.l.b16 %v262
        %v450 = vunpack.c.h.b16 %v262
        %v451 = vunpack.c.l.b16 %v263
        %v452 = vunpack.c.h.b16 %v263
        %v453 = vunpack.c.l.b16 %v264
        %v454 = vunpack.c.h.b16 %v264
        %v455 = vunpack.c.l.b16 %v265
        %v456 = vunpack.c.h.b16 %v265
        %v457 = vunpack.c.l.b16 %v266
        %v458 = vunpack.c.h.b16 %v266
        %v459 = vunpack.c.l.b16 %v267
        %v460 = vunpack.c.h.b16 %v267
        %v461 = vunpack.c.l.b16 %v268
        %v462 = vunpack.c.h.b16 %v268
        %v463 = vunpack.c.l.b16 %v269
        %v464 = vunpack.c.h.b16 %v269
        %v465 = vunpack.c.l.b16 %v270
        %v466 = vunpack.c.h.b16 %v270
        %v467 = vunpack.c.l.b16 %v271
        %v468 = vunpack.c.h.b16 %v271
        %v469 = vunpack.c.l.b16 %v272
        %v470 = vunpack.c.h.b16 %v272
        %v471 = vunpack.c.l.b16 %v273
        %v472 = vunpack.c.h.b16 %v273
        %v473 = vunpack.c.l.b16 %v274
        %v474 = vunpack.c.h.b16 %v274
        %v475 = vunpack.c.l.b16 %v275
        %v476 = vunpack.c.h.b16 %v275
        %v477 = vunpack.c.l.b16 %v276
        %v478 = vunpack.c.h.b16 %v276
        %v479 = vunpack.c.l.b16 %v277
        %v480 = vunpack.c.h.b16 %v277
        %v481 = vunpack.c.l.b16 %v278
        %v482 = vunpack.c.h.b16 %v278
        %v483 = vunpack.c.l.b16 %v279
        %v484 = vunpack.c.h.b16 %v279
        %v485 = vunpack.c.l.b16 %v280
        %v486 = vunpack.c.h.b16 %v280
        %v487 = vunpack.c.l.b16 %v281
        %v488 = vunpack.c.h.b16 %v281
        %v489 = vunpack.c.l.b16 %v282
        %v490 = vunpack.c.h.b16 %v282
        %v491 = vunpack.c.l.b16 %v283
        %v492 = vunpack.c.h.b16 %v283
        %v493 = vunpack.c.l.b16 %v284
        %v494 = vunpack.c.h.b16 %v284
        %v495 = vunpack.c.l.b16 %v285
        %v496 = vunpack.c.h.b16 %v285
        %v497 = vunpack.c.l.b16 %v286
        %v498 = vunpack.c.h.b16 %v286
        %v499 = vunpack.c.l.b16 %v287
        %v500 = vunpack.c.h.b16 %v287
        %v501 = vunpack.c.l.b16 %v288
        %v502 = vunpack.c.h.b16 %v288
        %v503 = vunpack.c.l.b16 %v289
        %v504 = vunpack.c.h.b16 %v289
        %v505 = vunpack.c.l.b16 %v290
        %v506 = vunpack.c.h.b16 %v290
        %v507 = vunpack.c.l.b16 %v291
        %v508 = vunpack.c.h.b16 %v291
        %v509 = vunpack.c.l.b16 %v292
        %v510 = vunpack.c.h.b16 %v292
        %v511 = vunpack.c.l.b16 %v293
        %v512 = vunpack.c.h.b16 %v293
        %v513 = vunpack.c.l.b16 %v294
        %v514 = vunpack.c.h.b16 %v294
        %v515 = vunpack.c.l.b16 %v295
        %v516 = vunpack.c.h.b16 %v295
        %v517 = vunpack.c.l.b16 %v296
        %v518 = vunpack.c.h.b16 %v296
        %v519 = vunpack.c.l.b16 %v297
        %v520 = vunpack.c.h.b16 %v297
        %v521 = vunpack.c.l.b16 %v298
        %v522 = vunpack.c.h.b16 %v298
        %v523 = vpack.c.b16 %v397, %v395
        %v524 = vpack.c.b16 %v398, %v396
        %v525 = vpack.c.b16 %v401, %v399
        %v526 = vpack.c.b16 %v402, %v400
        %v527 = vpack.c.b16 %v405, %v403
        %v528 = vpack.c.b16 %v406, %v404
        %v529 = vpack.c.b16 %v409, %v407
        %v530 = vpack.c.b16 %v410, %v408
        %v531 = vpack.c.b16 %v413, %v411
        %v532 = vpack.c.b16 %v414, %v412
        %v533 = vpack.c.b16 %v417, %v415
        %v534 = vpack.c.b16 %v418, %v416
        %v535 = vpack.c.b16 %v421, %v419
        %v536 = vpack.c.b16 %v422, %v420
        %v537 = vpack.c.b16 %v425, %v423
        %v538 = vpack.c.b16 %v426, %v424
        %v539 = vpack.c.b16 %v429, %v427
        %v540 = vpack.c.b16 %v430, %v428
        %v541 = vpack.c.b16 %v433, %v431
        %v542 = vpack.c.b16 %v434, %v432
        %v543 = vpack.c.b16 %v437, %v435
        %v544 = vpack.c.b16 %v438, %v436
        %v545 = vpack.c.b16 %v441, %v439
        %v546 = vpack.c.b16 %v442, %v440
        %v547 = vpack.c.b16 %v445, %v443
        %v548 = vpack.c.b16 %v446, %v444
        %v549 = vpack.c.b16 %v449, %v447
        %v550 = vpack.c.b16 %v450, %v448
        %v551 = vpack.c.b16 %v453, %v451
        %v552 = vpack.c.b16 %v454, %v452
        %v553 = vpack.c.b16 %v457, %v455
        %v554 = vpack.c.b16 %v458, %v456
        %v555 = vpack.c.b16 %v461, %v459
        %v556 = vpack.c.b16 %v462, %v460
        %v557 = vpack.c.b16 %v465, %v463
        %v558 = vpack.c.b16 %v466, %v464
        %v559 = vpack.c.b16 %v469, %v467
        %v560 = vpack.c.b16 %v470, %v468
        %v561 = vpack.c.b16 %v473, %v471
        %v562 = vpack.c.b16 %v474, %v472
        %v563 = vpack.c.b16 %v477, %v475
        %v564 = vpack.c.b16 %v478, %v476
        %v565 = vpack.c.b16 %v481, %v479
        %v566 = vpack.c.b16 %v482, %v480
        %v567 = vpack.c.b16 %v485, %v483
        %v568 = vpack.c.b16 %v486, %v484
        %v569 = vpack.c.b16 %v489, %v487
        %v570 = vpack.c.b16 %v490, %v488
        %v571 = vpack.c.b16 %v493, %v491
        %v572 = vpack.c.b16 %v494, %v492
        %v573 = vpack.c.b16 %v497, %v495
        %v574 = vpack.c.b16 %v498, %v496
        %v575 = vpack.c.b16 %v501, %v499
        %v576 = vpack.c.b16 %v502, %v500
        %v577 = vpack.c.b16 %v505, %v503
        %v578 = vpack.c.b16 %v506, %v504
        %v579 = vpack.c.b16 %v509, %v507
        %v580 = vpack.c.b16 %v510, %v508
        %v581 = vpack.c.b16 %v513, %v511
        %v582 = vpack.c.b16 %v514, %v512
        %v583 = vpack.c.b16 %v517, %v515
        %v584 = vpack.c.b16 %v518, %v516
        %v585 = vpack.c.b16 %v521, %v519
        %v586 = vpack.c.b16 %v522, %v520
        %v683 = vunpack.c.l.b16 %v299
        %v684 = vunpack.c.l.b16 %v300
        %v685 = vunpack.c.l.b16 %v301
        %v686 = vunpack.c.l.b16 %v302
        %v687 = vunpack.c.l.b16 %v303
        %v688 = vunpack.c.l.b16 %v304
        %v689 = vunpack.c.l.b16 %v305
        %v690 = vunpack.c.l.b16 %v306
        %v691 = vunpack.c.l.b16 %v307
        %v692 = vunpack.c.l.b16 %v308
        %v693 = vunpack.c.l.b16 %v309
        %v694 = vunpack.c.l.b16 %v310
        %v695 = vunpack.c.l.b16 %v311
        %v696 = vunpack.c.l.b16 %v312
        %v697 = vunpack.c.l.b16 %v313
        %v698 = vunpack.c.l.b16 %v314
        %v699 = vunpack.c.l.b16 %v315
        %v700 = vunpack.c.l.b16 %v316
        %v701 = vunpack.c.l.b16 %v317
        %v702 = vunpack.c.l.b16 %v318
        %v703 = vunpack.c.l.b16 %v319
        %v704 = vunpack.c.l.b16 %v320
        %v705 = vunpack.c.l.b16 %v321
        %v706 = vunpack.c.l.b16 %v322
        %v707 = vunpack.c.l.b16 %v323
        %v708 = vunpack.c.l.b16 %v324
        %v709 = vunpack.c.l.b16 %v325
        %v710 = vunpack.c.l.b16 %v326
        %v711 = vunpack.c.l.b16 %v327
        %v712 = vunpack.c.l.b16 %v328
        %v713 = vunpack.c.l.b16 %v329
        %v714 = vunpack.c.l.b16 %v330
        %v715 = vpack.c.b16 %v684, %v683
        %v716 = vpack.c.b16 %v686, %v685
        %v717 = vpack.c.b16 %v688, %v687
        %v718 = vpack.c.b16 %v690, %v689
        %v719 = vpack.c.b16 %v692, %v691
        %v720 = vpack.c.b16 %v694, %v693
        %v721 = vpack.c.b16 %v696, %v695
        %v722 = vpack.c.b16 %v698, %v697
        %v723 = vpack.c.b16 %v700, %v699
        %v724 = vpack.c.b16 %v702, %v701
        %v725 = vpack.c.b16 %v704, %v703
        %v726 = vpack.c.b16 %v706, %v705
        %v727 = vpack.c.b16 %v708, %v707
        %v728 = vpack.c.b16 %v710, %v709
        %v729 = vpack.c.b16 %v712, %v711
        %v730 = vpack.c.b16 %v714, %v713
        %747 = vmatprep.subr.bf16.mxu0 0
        %748 = vmatpush1.bf16.msra.mxu0 %v722
        %749 = vmatprep.subr.bf16.mxu0 0
        %750 = vmatpush1.bf16.msra.mxu0 %v721
        %751 = vmatprep.subr.bf16.mxu0 0
        %752 = vmatpush1.bf16.msra.mxu0 %v720
        %753 = vmatprep.subr.bf16.mxu0 0
        %754 = vmatpush1.bf16.msra.mxu0 %v719
        %755 = vmatprep.subr.bf16.mxu0 0
        %756 = vmatpush1.bf16.msra.mxu0 %v718
        %757 = vmatprep.subr.bf16.mxu0 0
        %758 = vmatpush1.bf16.msra.mxu0 %v717
        %759 = vmatprep.subr.bf16.mxu0 0
        %760 = vmatpush1.bf16.msra.mxu0 %v716
        %761 = vmatprep.subr.bf16.mxu0 0
        %762 = vmatpush1.bf16.msra.mxu0 %v715
        %763 = vmatprep.subr.bf16.mxu0 0
        %764 = vmatpush2.bf16.msra.mxu0 %v730
        %765 = vmatprep.subr.bf16.mxu0 0
        %766 = vmatpush2.bf16.msra.mxu0 %v729
        %767 = vmatprep.subr.bf16.mxu0 0
        %768 = vmatpush2.bf16.msra.mxu0 %v728
        %769 = vmatprep.subr.bf16.mxu0 0
        %770 = vmatpush2.bf16.msra.mxu0 %v727
        %771 = vmatprep.subr.bf16.mxu0 0
        %772 = vmatpush2.bf16.msra.mxu0 %v726
        %773 = vmatprep.subr.bf16.mxu0 0
        %774 = vmatpush2.bf16.msra.mxu0 %v725
        %775 = vmatprep.subr.bf16.mxu0 0
        %776 = vmatpush2.bf16.msra.mxu0 %v724
        %777 = vmatprep.subr.bf16.mxu0 0
        %778 = vmatpush2.bf16.msra.mxu0 %v723
        %779 = vmatprep.mubr.bf16.mxu0 %v524
        %780 = vmatmul.mubr.bf16.gmra.mxu0 %v523
        %v781 = vpop.f32.mrf.mxu0
        %v782 = vadd.f32 0.0, %v781
        %v783 = vpop.f32.mrf.mxu0
        %v784 = vpop.f32.mrf.mxu0
        %v785 = vadd.f32 0.0, %v784
        %v786 = vpop.f32.mrf.mxu0
        %787 = vmatprep.mubr.bf16.mxu0 %v526
        %788 = vmatmul.mubr.bf16.gmra.mxu0 %v525
        %v789 = vpop.f32.mrf.mxu0
        %v790 = vadd.f32 0.0, %v789
        %v791 = vpop.f32.mrf.mxu0
        %v792 = vpop.f32.mrf.mxu0
        %v793 = vadd.f32 0.0, %v792
        %v794 = vpop.f32.mrf.mxu0
        %795 = vmatprep.mubr.bf16.mxu0 %v528
        %796 = vmatmul.mubr.bf16.gmra.mxu0 %v527
        %v797 = vpop.f32.mrf.mxu0
        %v798 = vadd.f32 0.0, %v797
        %v799 = vpop.f32.mrf.mxu0
        %v800 = vpop.f32.mrf.mxu0
        %v801 = vadd.f32 0.0, %v800
        %v802 = vpop.f32.mrf.mxu0
        %803 = vmatprep.mubr.bf16.mxu0 %v530
        %804 = vmatmul.mubr.bf16.gmra.mxu0 %v529
        %v805 = vpop.f32.mrf.mxu0
        %v806 = vadd.f32 0.0, %v805
        %v807 = vpop.f32.mrf.mxu0
        %v808 = vpop.f32.mrf.mxu0
        %v809 = vadd.f32 0.0, %v808
        %v810 = vpop.f32.mrf.mxu0
        %811 = vmatprep.mubr.bf16.mxu0 %v532
        %812 = vmatmul.mubr.bf16.gmra.mxu0 %v531
        %v813 = vpop.f32.mrf.mxu0
        %v814 = vadd.f32 0.0, %v813
        %v815 = vpop.f32.mrf.mxu0
        %v816 = vpop.f32.mrf.mxu0
        %v817 = vadd.f32 0.0, %v816
        %v818 = vpop.f32.mrf.mxu0
        %819 = vmatprep.mubr.bf16.mxu0 %v534
        %820 = vmatmul.mubr.bf16.gmra.mxu0 %v533
        %v821 = vpop.f32.mrf.mxu0
        %v822 = vadd.f32 0.0, %v821
        %v823 = vpop.f32.mrf.mxu0
        %v824 = vpop.f32.mrf.mxu0
        %v825 = vadd.f32 0.0, %v824
        %v826 = vpop.f32.mrf.mxu0
        %827 = vmatprep.mubr.bf16.mxu0 %v536
        %828 = vmatmul.mubr.bf16.gmra.mxu0 %v535
        %v829 = vpop.f32.mrf.mxu0
        %v830 = vadd.f32 0.0, %v829
        %v831 = vpop.f32.mrf.mxu0
        %v832 = vpop.f32.mrf.mxu0
        %v833 = vadd.f32 0.0, %v832
        %v834 = vpop.f32.mrf.mxu0
        %835 = vmatprep.mubr.bf16.mxu0 %v538
        %836 = vmatmul.mubr.bf16.gmra.mxu0 %v537
        %v837 = vpop.f32.mrf.mxu0
        %v838 = vadd.f32 0.0, %v837
        %v839 = vpop.f32.mrf.mxu0
        %v840 = vpop.f32.mrf.mxu0
        %v841 = vadd.f32 0.0, %v840
        %v842 = vpop.f32.mrf.mxu0
        %843 = vmatprep.mubr.bf16.mxu0 %v540
        %844 = vmatmul.mubr.bf16.gmra.mxu0 %v539
        %v845 = vpop.f32.mrf.mxu0
        %v846 = vadd.f32 0.0, %v845
        %v847 = vpop.f32.mrf.mxu0
        %v848 = vpop.f32.mrf.mxu0
        %v849 = vadd.f32 0.0, %v848
        %v850 = vpop.f32.mrf.mxu0
        %851 = vmatprep.mubr.bf16.mxu0 %v542
        %852 = vmatmul.mubr.bf16.gmra.mxu0 %v541
        %v853 = vpop.f32.mrf.mxu0
        %v854 = vadd.f32 0.0, %v853
        %v855 = vpop.f32.mrf.mxu0
        %v856 = vpop.f32.mrf.mxu0
        %v857 = vadd.f32 0.0, %v856
        %v858 = vpop.f32.mrf.mxu0
        %859 = vmatprep.mubr.bf16.mxu0 %v544
        %860 = vmatmul.mubr.bf16.gmra.mxu0 %v543
        %v861 = vpop.f32.mrf.mxu0
        %v862 = vadd.f32 0.0, %v861
        %v863 = vpop.f32.mrf.mxu0
        %v864 = vpop.f32.mrf.mxu0
        %v865 = vadd.f32 0.0, %v864
        %v866 = vpop.f32.mrf.mxu0
        %867 = vmatprep.mubr.bf16.mxu0 %v546
        %868 = vmatmul.mubr.bf16.gmra.mxu0 %v545
        %v869 = vpop.f32.mrf.mxu0
        %v870 = vadd.f32 0.0, %v869
        %v871 = vpop.f32.mrf.mxu0
        %v872 = vpop.f32.mrf.mxu0
        %v873 = vadd.f32 0.0, %v872
        %v874 = vpop.f32.mrf.mxu0
        %875 = vmatprep.mubr.bf16.mxu0 %v548
        %876 = vmatmul.mubr.bf16.gmra.mxu0 %v547
        %v877 = vpop.f32.mrf.mxu0
        %v878 = vadd.f32 0.0, %v877
        %v879 = vpop.f32.mrf.mxu0
        %v880 = vpop.f32.mrf.mxu0
        %v881 = vadd.f32 0.0, %v880
        %v882 = vpop.f32.mrf.mxu0
        %883 = vmatprep.mubr.bf16.mxu0 %v550
        %884 = vmatmul.mubr.bf16.gmra.mxu0 %v549
        %v885 = vpop.f32.mrf.mxu0
        %v886 = vadd.f32 0.0, %v885
        %v887 = vpop.f32.mrf.mxu0
        %v888 = vpop.f32.mrf.mxu0
        %v889 = vadd.f32 0.0, %v888
        %v890 = vpop.f32.mrf.mxu0
        %891 = vmatprep.mubr.bf16.mxu0 %v552
        %892 = vmatmul.mubr.bf16.gmra.mxu0 %v551
        %v893 = vpop.f32.mrf.mxu0
        %v894 = vadd.f32 0.0, %v893
        %v895 = vpop.f32.mrf.mxu0
        %v896 = vpop.f32.mrf.mxu0
        %v897 = vadd.f32 0.0, %v896
        %v898 = vpop.f32.mrf.mxu0
        %899 = vmatprep.mubr.bf16.mxu0 %v554
        %900 = vmatmul.mubr.bf16.gmra.mxu0 %v553
        %v901 = vpop.f32.mrf.mxu0
        %v902 = vadd.f32 0.0, %v901
        %v903 = vpop.f32.mrf.mxu0
        %v904 = vpop.f32.mrf.mxu0
        %v905 = vadd.f32 0.0, %v904
        %v906 = vpop.f32.mrf.mxu0
        %907 = vmatprep.mubr.bf16.mxu0 %v556
        %908 = vmatmul.mubr.bf16.gmra.mxu0 %v555
        %v909 = vpop.f32.mrf.mxu0
        %v910 = vadd.f32 0.0, %v909
        %v911 = vpop.f32.mrf.mxu0
        %v912 = vpop.f32.mrf.mxu0
        %v913 = vadd.f32 0.0, %v912
        %v914 = vpop.f32.mrf.mxu0
        %915 = vmatprep.mubr.bf16.mxu0 %v558
        %916 = vmatmul.mubr.bf16.gmra.mxu0 %v557
        %v917 = vpop.f32.mrf.mxu0
        %v918 = vadd.f32 0.0, %v917
        %v919 = vpop.f32.mrf.mxu0
        %v920 = vpop.f32.mrf.mxu0
        %v921 = vadd.f32 0.0, %v920
        %v922 = vpop.f32.mrf.mxu0
        %923 = vmatprep.mubr.bf16.mxu0 %v560
        %924 = vmatmul.mubr.bf16.gmra.mxu0 %v559
        %v925 = vpop.f32.mrf.mxu0
        %v926 = vadd.f32 0.0, %v925
        %v927 = vpop.f32.mrf.mxu0
        %v928 = vpop.f32.mrf.mxu0
        %v929 = vadd.f32 0.0, %v928
        %v930 = vpop.f32.mrf.mxu0
        %931 = vmatprep.mubr.bf16.mxu0 %v562
        %932 = vmatmul.mubr.bf16.gmra.mxu0 %v561
        %v933 = vpop.f32.mrf.mxu0
        %v934 = vadd.f32 0.0, %v933
        %v935 = vpop.f32.mrf.mxu0
        %v936 = vpop.f32.mrf.mxu0
        %v937 = vadd.f32 0.0, %v936
        %v938 = vpop.f32.mrf.mxu0
        %939 = vmatprep.mubr.bf16.mxu0 %v564
        %940 = vmatmul.mubr.bf16.gmra.mxu0 %v563
        %v941 = vpop.f32.mrf.mxu0
        %v942 = vadd.f32 0.0, %v941
        %v943 = vpop.f32.mrf.mxu0
        %v944 = vpop.f32.mrf.mxu0
        %v945 = vadd.f32 0.0, %v944
        %v946 = vpop.f32.mrf.mxu0
        %947 = vmatprep.mubr.bf16.mxu0 %v566
        %948 = vmatmul.mubr.bf16.gmra.mxu0 %v565
        %v949 = vpop.f32.mrf.mxu0
        %v950 = vadd.f32 0.0, %v949
        %v951 = vpop.f32.mrf.mxu0
        %v952 = vpop.f32.mrf.mxu0
        %v953 = vadd.f32 0.0, %v952
        %v954 = vpop.f32.mrf.mxu0
        %955 = vmatprep.mubr.bf16.mxu0 %v568
        %956 = vmatmul.mubr.bf16.gmra.mxu0 %v567
        %v957 = vpop.f32.mrf.mxu0
        %v958 = vadd.f32 0.0, %v957
        %v959 = vpop.f32.mrf.mxu0
        %v960 = vpop.f32.mrf.mxu0
        %v961 = vadd.f32 0.0, %v960
        %v962 = vpop.f32.mrf.mxu0
        %963 = vmatprep.mubr.bf16.mxu0 %v570
        %964 = vmatmul.mubr.bf16.gmra.mxu0 %v569
        %v965 = vpop.f32.mrf.mxu0
        %v966 = vadd.f32 0.0, %v965
        %v967 = vpop.f32.mrf.mxu0
        %v968 = vpop.f32.mrf.mxu0
        %v969 = vadd.f32 0.0, %v968
        %v970 = vpop.f32.mrf.mxu0
        %971 = vmatprep.mubr.bf16.mxu0 %v572
        %972 = vmatmul.mubr.bf16.gmra.mxu0 %v571
        %v973 = vpop.f32.mrf.mxu0
        %v974 = vadd.f32 0.0, %v973
        %v975 = vpop.f32.mrf.mxu0
        %v976 = vpop.f32.mrf.mxu0
        %v977 = vadd.f32 0.0, %v976
        %v978 = vpop.f32.mrf.mxu0
        %979 = vmatprep.mubr.bf16.mxu0 %v574
        %980 = vmatmul.mubr.bf16.gmra.mxu0 %v573
        %v981 = vpop.f32.mrf.mxu0
        %v982 = vadd.f32 0.0, %v981
        %v983 = vpop.f32.mrf.mxu0
        %v984 = vpop.f32.mrf.mxu0
        %v985 = vadd.f32 0.0, %v984
        %v986 = vpop.f32.mrf.mxu0
        %987 = vmatprep.mubr.bf16.mxu0 %v576
        %988 = vmatmul.mubr.bf16.gmra.mxu0 %v575
        %v989 = vpop.f32.mrf.mxu0
        %v990 = vadd.f32 0.0, %v989
        %v991 = vpop.f32.mrf.mxu0
        %v992 = vpop.f32.mrf.mxu0
        %v993 = vadd.f32 0.0, %v992
        %v994 = vpop.f32.mrf.mxu0
        %995 = vmatprep.mubr.bf16.mxu0 %v578
        %996 = vmatmul.mubr.bf16.gmra.mxu0 %v577
        %v997 = vpop.f32.mrf.mxu0
        %v998 = vadd.f32 0.0, %v997
        %v999 = vpop.f32.mrf.mxu0
        %v1000 = vpop.f32.mrf.mxu0
        %v1001 = vadd.f32 0.0, %v1000
        %v1002 = vpop.f32.mrf.mxu0
        %1003 = vmatprep.mubr.bf16.mxu0 %v580
        %1004 = vmatmul.mubr.bf16.gmra.mxu0 %v579
        %v1005 = vpop.f32.mrf.mxu0
        %v1006 = vadd.f32 0.0, %v1005
        %v1007 = vpop.f32.mrf.mxu0
        %v1008 = vpop.f32.mrf.mxu0
        %v1009 = vadd.f32 0.0, %v1008
        %v1010 = vpop.f32.mrf.mxu0
        %1011 = vmatprep.mubr.bf16.mxu0 %v582
        %1012 = vmatmul.mubr.bf16.gmra.mxu0 %v581
        %v1013 = vpop.f32.mrf.mxu0
        %v1014 = vadd.f32 0.0, %v1013
        %v1015 = vpop.f32.mrf.mxu0
        %v1016 = vpop.f32.mrf.mxu0
        %v1017 = vadd.f32 0.0, %v1016
        %v1018 = vpop.f32.mrf.mxu0
        %1019 = vmatprep.mubr.bf16.mxu0 %v584
        %1020 = vmatmul.mubr.bf16.gmra.mxu0 %v583
        %v1021 = vpop.f32.mrf.mxu0
        %v1022 = vadd.f32 0.0, %v1021
        %v1023 = vpop.f32.mrf.mxu0
        %v1024 = vpop.f32.mrf.mxu0
        %v1025 = vadd.f32 0.0, %v1024
        %v1026 = vpop.f32.mrf.mxu0
        %1027 = vmatprep.mubr.bf16.mxu0 %v586
        %1028 = vmatmul.mubr.bf16.gmra.mxu0 %v585
        %v1029 = vpop.f32.mrf.mxu0
        %v1030 = vadd.f32 0.0, %v1029
        %v1031 = vpop.f32.mrf.mxu0
        %v1032 = vpop.f32.mrf.mxu0
        %v1033 = vadd.f32 0.0, %v1032
        %v1034 = vpop.f32.mrf.mxu0
        %1035 = vdwg.mxu0
        %v1036 = vld [vmem:[%s2] sm:$0x1]
        %v1038 = vlaneseq
        %v1039 = vshrl.u32 %v1038, 7
        %v1040 = vsub.s32 0, %v1039
        %v1041 = vrot.slane %v1036, %v1040
        %v1043 = vmul.f32 %v782, %v1041
        %v1044 = vmul.f32 %v785, %v1041
        %v1045 = vmul.f32 %v790, %v1041
        %v1046 = vmul.f32 %v793, %v1041
        %v1047 = vmul.f32 %v798, %v1041
        %v1048 = vmul.f32 %v801, %v1041
        %v1049 = vmul.f32 %v806, %v1041
        %v1050 = vmul.f32 %v809, %v1041
        %v1051 = vmul.f32 %v814, %v1041
        %v1052 = vmul.f32 %v817, %v1041
        %v1053 = vmul.f32 %v822, %v1041
        %v1054 = vmul.f32 %v825, %v1041
        %v1055 = vmul.f32 %v830, %v1041
        %v1056 = vmul.f32 %v833, %v1041
        %v1057 = vmul.f32 %v838, %v1041
        %v1058 = vmul.f32 %v841, %v1041
        %v1059 = vmul.f32 %v846, %v1041
        %v1060 = vmul.f32 %v849, %v1041
        %v1061 = vmul.f32 %v854, %v1041
        %v1062 = vmul.f32 %v857, %v1041
        %v1063 = vmul.f32 %v862, %v1041
        %v1064 = vmul.f32 %v865, %v1041
        %v1065 = vmul.f32 %v870, %v1041
        %v1066 = vmul.f32 %v873, %v1041
        %v1067 = vmul.f32 %v878, %v1041
        %v1068 = vmul.f32 %v881, %v1041
        %v1069 = vmul.f32 %v886, %v1041
        %v1070 = vmul.f32 %v889, %v1041
        %v1071 = vmul.f32 %v894, %v1041
        %v1072 = vmul.f32 %v897, %v1041
        %v1073 = vmul.f32 %v902, %v1041
        %v1074 = vmul.f32 %v905, %v1041
        %v1075 = vmul.f32 %v910, %v1041
        %v1076 = vmul.f32 %v913, %v1041
        %v1077 = vmul.f32 %v918, %v1041
        %v1078 = vmul.f32 %v921, %v1041
        %v1079 = vmul.f32 %v926, %v1041
        %v1080 = vmul.f32 %v929, %v1041
        %v1081 = vmul.f32 %v934, %v1041
        %v1082 = vmul.f32 %v937, %v1041
        %v1083 = vmul.f32 %v942, %v1041
        %v1084 = vmul.f32 %v945, %v1041
        %v1085 = vmul.f32 %v950, %v1041
        %v1086 = vmul.f32 %v953, %v1041
        %v1087 = vmul.f32 %v958, %v1041
        %v1088 = vmul.f32 %v961, %v1041
        %v1089 = vmul.f32 %v966, %v1041
        %v1090 = vmul.f32 %v969, %v1041
        %v1091 = vmul.f32 %v974, %v1041
        %v1092 = vmul.f32 %v977, %v1041
        %v1093 = vmul.f32 %v982, %v1041
        %v1094 = vmul.f32 %v985, %v1041
        %v1095 = vmul.f32 %v990, %v1041
        %v1096 = vmul.f32 %v993, %v1041
        %v1097 = vmul.f32 %v998, %v1041
        %v1098 = vmul.f32 %v1001, %v1041
        %v1099 = vmul.f32 %v1006, %v1041
        %v1100 = vmul.f32 %v1009, %v1041
        %v1101 = vmul.f32 %v1014, %v1041
        %v1102 = vmul.f32 %v1017, %v1041
        %v1103 = vmul.f32 %v1022, %v1041
        %v1104 = vmul.f32 %v1025, %v1041
        %v1105 = vmul.f32 %v1030, %v1041
        %v1106 = vmul.f32 %v1033, %v1041
        %v1107 = vld [vmem:[%s3] sm:$0x1]
        %v1109 = vlaneseq
        %v1110 = vshrl.u32 %v1109, 7
        %v1111 = vsub.s32 0, %v1110
        %v1112 = vrot.slane %v1107, %v1111
        %v1114 = vadd.f32 %v1043, %v1112
        %v1115 = vadd.f32 %v1044, %v1112
        %v1116 = vadd.f32 %v1045, %v1112
        %v1117 = vadd.f32 %v1046, %v1112
        %v1118 = vadd.f32 %v1047, %v1112
        %v1119 = vadd.f32 %v1048, %v1112
        %v1120 = vadd.f32 %v1049, %v1112
        %v1121 = vadd.f32 %v1050, %v1112
        %v1122 = vadd.f32 %v1051, %v1112
        %v1123 = vadd.f32 %v1052, %v1112
        %v1124 = vadd.f32 %v1053, %v1112
        %v1125 = vadd.f32 %v1054, %v1112
        %v1126 = vadd.f32 %v1055, %v1112
        %v1127 = vadd.f32 %v1056, %v1112
        %v1128 = vadd.f32 %v1057, %v1112
        %v1129 = vadd.f32 %v1058, %v1112
        %v1130 = vadd.f32 %v1059, %v1112
        %v1131 = vadd.f32 %v1060, %v1112
        %v1132 = vadd.f32 %v1061, %v1112
        %v1133 = vadd.f32 %v1062, %v1112
        %v1134 = vadd.f32 %v1063, %v1112
        %v1135 = vadd.f32 %v1064, %v1112
        %v1136 = vadd.f32 %v1065, %v1112
        %v1137 = vadd.f32 %v1066, %v1112
        %v1138 = vadd.f32 %v1067, %v1112
        %v1139 = vadd.f32 %v1068, %v1112
        %v1140 = vadd.f32 %v1069, %v1112
        %v1141 = vadd.f32 %v1070, %v1112
        %v1142 = vadd.f32 %v1071, %v1112
        %v1143 = vadd.f32 %v1072, %v1112
        %v1144 = vadd.f32 %v1073, %v1112
        %v1145 = vadd.f32 %v1074, %v1112
        %v1146 = vadd.f32 %v1075, %v1112
        %v1147 = vadd.f32 %v1076, %v1112
        %v1148 = vadd.f32 %v1077, %v1112
        %v1149 = vadd.f32 %v1078, %v1112
        %v1150 = vadd.f32 %v1079, %v1112
        %v1151 = vadd.f32 %v1080, %v1112
        %v1152 = vadd.f32 %v1081, %v1112
        %v1153 = vadd.f32 %v1082, %v1112
        %v1154 = vadd.f32 %v1083, %v1112
        %v1155 = vadd.f32 %v1084, %v1112
        %v1156 = vadd.f32 %v1085, %v1112
        %v1157 = vadd.f32 %v1086, %v1112
        %v1158 = vadd.f32 %v1087, %v1112
        %v1159 = vadd.f32 %v1088, %v1112
        %v1160 = vadd.f32 %v1089, %v1112
        %v1161 = vadd.f32 %v1090, %v1112
        %v1162 = vadd.f32 %v1091, %v1112
        %v1163 = vadd.f32 %v1092, %v1112
        %v1164 = vadd.f32 %v1093, %v1112
        %v1165 = vadd.f32 %v1094, %v1112
        %v1166 = vadd.f32 %v1095, %v1112
        %v1167 = vadd.f32 %v1096, %v1112
        %v1168 = vadd.f32 %v1097, %v1112
        %v1169 = vadd.f32 %v1098, %v1112
        %v1170 = vadd.f32 %v1099, %v1112
        %v1171 = vadd.f32 %v1100, %v1112
        %v1172 = vadd.f32 %v1101, %v1112
        %v1173 = vadd.f32 %v1102, %v1112
        %v1174 = vadd.f32 %v1103, %v1112
        %v1175 = vadd.f32 %v1104, %v1112
        %v1176 = vadd.f32 %v1105, %v1112
        %v1177 = vadd.f32 %v1106, %v1112
        %v1178 = vmax.f32 %v1114, 0.0
        %v1179 = vmax.f32 %v1115, 0.0
        %v1180 = vmax.f32 %v1116, 0.0
        %v1181 = vmax.f32 %v1117, 0.0
        %v1182 = vmax.f32 %v1118, 0.0
        %v1183 = vmax.f32 %v1119, 0.0
        %v1184 = vmax.f32 %v1120, 0.0
        %v1185 = vmax.f32 %v1121, 0.0
        %v1186 = vmax.f32 %v1122, 0.0
        %v1187 = vmax.f32 %v1123, 0.0
        %v1188 = vmax.f32 %v1124, 0.0
        %v1189 = vmax.f32 %v1125, 0.0
        %v1190 = vmax.f32 %v1126, 0.0
        %v1191 = vmax.f32 %v1127, 0.0
        %v1192 = vmax.f32 %v1128, 0.0
        %v1193 = vmax.f32 %v1129, 0.0
        %v1194 = vmax.f32 %v1130, 0.0
        %v1195 = vmax.f32 %v1131, 0.0
        %v1196 = vmax.f32 %v1132, 0.0
        %v1197 = vmax.f32 %v1133, 0.0
        %v1198 = vmax.f32 %v1134, 0.0
        %v1199 = vmax.f32 %v1135, 0.0
        %v1200 = vmax.f32 %v1136, 0.0
        %v1201 = vmax.f32 %v1137, 0.0
        %v1202 = vmax.f32 %v1138, 0.0
        %v1203 = vmax.f32 %v1139, 0.0
        %v1204 = vmax.f32 %v1140, 0.0
        %v1205 = vmax.f32 %v1141, 0.0
        %v1206 = vmax.f32 %v1142, 0.0
        %v1207 = vmax.f32 %v1143, 0.0
        %v1208 = vmax.f32 %v1144, 0.0
        %v1209 = vmax.f32 %v1145, 0.0
        %v1210 = vmax.f32 %v1146, 0.0
        %v1211 = vmax.f32 %v1147, 0.0
        %v1212 = vmax.f32 %v1148, 0.0
        %v1213 = vmax.f32 %v1149, 0.0
        %v1214 = vmax.f32 %v1150, 0.0
        %v1215 = vmax.f32 %v1151, 0.0
        %v1216 = vmax.f32 %v1152, 0.0
        %v1217 = vmax.f32 %v1153, 0.0
        %v1218 = vmax.f32 %v1154, 0.0
        %v1219 = vmax.f32 %v1155, 0.0
        %v1220 = vmax.f32 %v1156, 0.0
        %v1221 = vmax.f32 %v1157, 0.0
        %v1222 = vmax.f32 %v1158, 0.0
        %v1223 = vmax.f32 %v1159, 0.0
        %v1224 = vmax.f32 %v1160, 0.0
        %v1225 = vmax.f32 %v1161, 0.0
        %v1226 = vmax.f32 %v1162, 0.0
        %v1227 = vmax.f32 %v1163, 0.0
        %v1228 = vmax.f32 %v1164, 0.0
        %v1229 = vmax.f32 %v1165, 0.0
        %v1230 = vmax.f32 %v1166, 0.0
        %v1231 = vmax.f32 %v1167, 0.0
        %v1232 = vmax.f32 %v1168, 0.0
        %v1233 = vmax.f32 %v1169, 0.0
        %v1234 = vmax.f32 %v1170, 0.0
        %v1235 = vmax.f32 %v1171, 0.0
        %v1236 = vmax.f32 %v1172, 0.0
        %v1237 = vmax.f32 %v1173, 0.0
        %v1238 = vmax.f32 %v1174, 0.0
        %v1239 = vmax.f32 %v1175, 0.0
        %v1240 = vmax.f32 %v1176, 0.0
        %v1241 = vmax.f32 %v1177, 0.0
        %v1242 = vpack.c.bf16 %v1179, %v1178
        %v1243 = vpack.c.bf16 %v1181, %v1180
        %v1244 = vpack.c.bf16 %v1183, %v1182
        %v1245 = vpack.c.bf16 %v1185, %v1184
        %v1246 = vpack.c.bf16 %v1187, %v1186
        %v1247 = vpack.c.bf16 %v1189, %v1188
        %v1248 = vpack.c.bf16 %v1191, %v1190
        %v1249 = vpack.c.bf16 %v1193, %v1192
        %v1250 = vpack.c.bf16 %v1195, %v1194
        %v1251 = vpack.c.bf16 %v1197, %v1196
        %v1252 = vpack.c.bf16 %v1199, %v1198
        %v1253 = vpack.c.bf16 %v1201, %v1200
        %v1254 = vpack.c.bf16 %v1203, %v1202
        %v1255 = vpack.c.bf16 %v1205, %v1204
        %v1256 = vpack.c.bf16 %v1207, %v1206
        %v1257 = vpack.c.bf16 %v1209, %v1208
        %v1258 = vpack.c.bf16 %v1211, %v1210
        %v1259 = vpack.c.bf16 %v1213, %v1212
        %v1260 = vpack.c.bf16 %v1215, %v1214
        %v1261 = vpack.c.bf16 %v1217, %v1216
        %v1262 = vpack.c.bf16 %v1219, %v1218
        %v1263 = vpack.c.bf16 %v1221, %v1220
        %v1264 = vpack.c.bf16 %v1223, %v1222
        %v1265 = vpack.c.bf16 %v1225, %v1224
        %v1266 = vpack.c.bf16 %v1227, %v1226
        %v1267 = vpack.c.bf16 %v1229, %v1228
        %v1268 = vpack.c.bf16 %v1231, %v1230
        %v1269 = vpack.c.bf16 %v1233, %v1232
        %v1270 = vpack.c.bf16 %v1235, %v1234
        %v1271 = vpack.c.bf16 %v1237, %v1236
        %v1272 = vpack.c.bf16 %v1239, %v1238
        %v1273 = vpack.c.bf16 %v1241, %v1240
        %v1306 = vunpack.c.l.b16 %v1242
        %v1307 = vunpack.c.h.b16 %v1242
        %v1308 = vunpack.c.l.b16 %v1243
        %v1309 = vunpack.c.h.b16 %v1243
        %v1310 = vunpack.c.l.b16 %v1244
        %v1311 = vunpack.c.h.b16 %v1244
        %v1312 = vunpack.c.l.b16 %v1245
        %v1313 = vunpack.c.h.b16 %v1245
        %v1314 = vunpack.c.l.b16 %v1246
        %v1315 = vunpack.c.h.b16 %v1246
        %v1316 = vunpack.c.l.b16 %v1247
        %v1317 = vunpack.c.h.b16 %v1247
        %v1318 = vunpack.c.l.b16 %v1248
        %v1319 = vunpack.c.h.b16 %v1248
        %v1320 = vunpack.c.l.b16 %v1249
        %v1321 = vunpack.c.h.b16 %v1249
        %v1322 = vunpack.c.l.b16 %v1250
        %v1323 = vunpack.c.h.b16 %v1250
        %v1324 = vunpack.c.l.b16 %v1251
        %v1325 = vunpack.c.h.b16 %v1251
        %v1326 = vunpack.c.l.b16 %v1252
        %v1327 = vunpack.c.h.b16 %v1252
        %v1328 = vunpack.c.l.b16 %v1253
        %v1329 = vunpack.c.h.b16 %v1253
        %v1330 = vunpack.c.l.b16 %v1254
        %v1331 = vunpack.c.h.b16 %v1254
        %v1332 = vunpack.c.l.b16 %v1255
        %v1333 = vunpack.c.h.b16 %v1255
        %v1334 = vunpack.c.l.b16 %v1256
        %v1335 = vunpack.c.h.b16 %v1256
        %v1336 = vunpack.c.l.b16 %v1257
        %v1337 = vunpack.c.h.b16 %v1257
        %v1338 = vunpack.c.l.b16 %v1258
        %v1339 = vunpack.c.h.b16 %v1258
        %v1340 = vunpack.c.l.b16 %v1259
        %v1341 = vunpack.c.h.b16 %v1259
        %v1342 = vunpack.c.l.b16 %v1260
        %v1343 = vunpack.c.h.b16 %v1260
        %v1344 = vunpack.c.l.b16 %v1261
        %v1345 = vunpack.c.h.b16 %v1261
        %v1346 = vunpack.c.l.b16 %v1262
        %v1347 = vunpack.c.h.b16 %v1262
        %v1348 = vunpack.c.l.b16 %v1263
        %v1349 = vunpack.c.h.b16 %v1263
        %v1350 = vunpack.c.l.b16 %v1264
        %v1351 = vunpack.c.h.b16 %v1264
        %v1352 = vunpack.c.l.b16 %v1265
        %v1353 = vunpack.c.h.b16 %v1265
        %v1354 = vunpack.c.l.b16 %v1266
        %v1355 = vunpack.c.h.b16 %v1266
        %v1356 = vunpack.c.l.b16 %v1267
        %v1357 = vunpack.c.h.b16 %v1267
        %v1358 = vunpack.c.l.b16 %v1268
        %v1359 = vunpack.c.h.b16 %v1268
        %v1360 = vunpack.c.l.b16 %v1269
        %v1361 = vunpack.c.h.b16 %v1269
        %v1362 = vunpack.c.l.b16 %v1270
        %v1363 = vunpack.c.h.b16 %v1270
        %v1364 = vunpack.c.l.b16 %v1271
        %v1365 = vunpack.c.h.b16 %v1271
        %v1366 = vunpack.c.l.b16 %v1272
        %v1367 = vunpack.c.h.b16 %v1272
        %v1368 = vunpack.c.l.b16 %v1273
        %v1369 = vunpack.c.h.b16 %v1273
        %v1370 = vpack.c.b16 %v1306, %v1306
        %v1371 = vpack.c.b16 %v1307, %v1307
        %v1372 = vpack.c.b16 %v1308, %v1308
        %v1373 = vpack.c.b16 %v1309, %v1309
        %v1374 = vpack.c.b16 %v1310, %v1310
        %v1375 = vpack.c.b16 %v1311, %v1311
        %v1376 = vpack.c.b16 %v1312, %v1312
        %v1377 = vpack.c.b16 %v1313, %v1313
        %v1378 = vpack.c.b16 %v1314, %v1314
        %v1379 = vpack.c.b16 %v1315, %v1315
        %v1380 = vpack.c.b16 %v1316, %v1316
        %v1381 = vpack.c.b16 %v1317, %v1317
        %v1382 = vpack.c.b16 %v1318, %v1318
        %v1383 = vpack.c.b16 %v1319, %v1319
        %v1384 = vpack.c.b16 %v1320, %v1320
        %v1385 = vpack.c.b16 %v1321, %v1321
        %v1386 = vpack.c.b16 %v1322, %v1322
        %v1387 = vpack.c.b16 %v1323, %v1323
        %v1388 = vpack.c.b16 %v1324, %v1324
        %v1389 = vpack.c.b16 %v1325, %v1325
        %v1390 = vpack.c.b16 %v1326, %v1326
        %v1391 = vpack.c.b16 %v1327, %v1327
        %v1392 = vpack.c.b16 %v1328, %v1328
        %v1393 = vpack.c.b16 %v1329, %v1329
        %v1394 = vpack.c.b16 %v1330, %v1330
        %v1395 = vpack.c.b16 %v1331, %v1331
        %v1396 = vpack.c.b16 %v1332, %v1332
        %v1397 = vpack.c.b16 %v1333, %v1333
        %v1398 = vpack.c.b16 %v1334, %v1334
        %v1399 = vpack.c.b16 %v1335, %v1335
        %v1400 = vpack.c.b16 %v1336, %v1336
        %v1401 = vpack.c.b16 %v1337, %v1337
        %v1402 = vpack.c.b16 %v1338, %v1338
        %v1403 = vpack.c.b16 %v1339, %v1339
        %v1404 = vpack.c.b16 %v1340, %v1340
        %v1405 = vpack.c.b16 %v1341, %v1341
        %v1406 = vpack.c.b16 %v1342, %v1342
        %v1407 = vpack.c.b16 %v1343, %v1343
        %v1408 = vpack.c.b16 %v1344, %v1344
        %v1409 = vpack.c.b16 %v1345, %v1345
        %v1410 = vpack.c.b16 %v1346, %v1346
        %v1411 = vpack.c.b16 %v1347, %v1347
        %v1412 = vpack.c.b16 %v1348, %v1348
        %v1413 = vpack.c.b16 %v1349, %v1349
        %v1414 = vpack.c.b16 %v1350, %v1350
        %v1415 = vpack.c.b16 %v1351, %v1351
        %v1416 = vpack.c.b16 %v1352, %v1352
        %v1417 = vpack.c.b16 %v1353, %v1353
        %v1418 = vpack.c.b16 %v1354, %v1354
        %v1419 = vpack.c.b16 %v1355, %v1355
        %v1420 = vpack.c.b16 %v1356, %v1356
        %v1421 = vpack.c.b16 %v1357, %v1357
        %v1422 = vpack.c.b16 %v1358, %v1358
        %v1423 = vpack.c.b16 %v1359, %v1359
        %v1424 = vpack.c.b16 %v1360, %v1360
        %v1425 = vpack.c.b16 %v1361, %v1361
        %v1426 = vpack.c.b16 %v1362, %v1362
        %v1427 = vpack.c.b16 %v1363, %v1363
        %v1428 = vpack.c.b16 %v1364, %v1364
        %v1429 = vpack.c.b16 %v1365, %v1365
        %v1430 = vpack.c.b16 %v1366, %v1366
        %v1431 = vpack.c.b16 %v1367, %v1367
        %v1432 = vpack.c.b16 %v1368, %v1368
        %v1433 = vpack.c.b16 %v1369, %v1369
        %1498 = vst [vmem:[%s231] sm:$0xf] %v1370
        %1499 = vst [vmem:[%s231 + $0x4] sm:$0xf] %v1371
        %1500 = vst [vmem:[%s231 + $0x8] sm:$0xf] %v1372
        %1501 = vst [vmem:[%s231 + $0xc] sm:$0xf] %v1373
        %1502 = vst [vmem:[%s231 + $0x10] sm:$0xf] %v1374
        %1503 = vst [vmem:[%s231 + $0x14] sm:$0xf] %v1375
        %1504 = vst [vmem:[%s231 + $0x18] sm:$0xf] %v1376
        %1505 = vst [vmem:[%s231 + $0x1c] sm:$0xf] %v1377
        %1506 = vst [vmem:[%s231 + $0x20] sm:$0xf] %v1378
        %1507 = vst [vmem:[%s231 + $0x24] sm:$0xf] %v1379
        %1508 = vst [vmem:[%s231 + $0x28] sm:$0xf] %v1380
        %1509 = vst [vmem:[%s231 + $0x2c] sm:$0xf] %v1381
        %1510 = vst [vmem:[%s231 + $0x30] sm:$0xf] %v1382
        %1511 = vst [vmem:[%s231 + $0x34] sm:$0xf] %v1383
        %1512 = vst [vmem:[%s231 + $0x38] sm:$0xf] %v1384
        %1513 = vst [vmem:[%s231 + $0x3c] sm:$0xf] %v1385
        %1514 = vst [vmem:[%s231 + $0x40] sm:$0xf] %v1386
        %1515 = vst [vmem:[%s231 + $0x44] sm:$0xf] %v1387
        %1516 = vst [vmem:[%s231 + $0x48] sm:$0xf] %v1388
        %1517 = vst [vmem:[%s231 + $0x4c] sm:$0xf] %v1389
        %1518 = vst [vmem:[%s231 + $0x50] sm:$0xf] %v1390
        %1519 = vst [vmem:[%s231 + $0x54] sm:$0xf] %v1391
        %1520 = vst [vmem:[%s231 + $0x58] sm:$0xf] %v1392
        %1521 = vst [vmem:[%s231 + $0x5c] sm:$0xf] %v1393
        %1522 = vst [vmem:[%s231 + $0x60] sm:$0xf] %v1394
        %1523 = vst [vmem:[%s231 + $0x64] sm:$0xf] %v1395
        %1524 = vst [vmem:[%s231 + $0x68] sm:$0xf] %v1396
        %1525 = vst [vmem:[%s231 + $0x6c] sm:$0xf] %v1397
        %1526 = vst [vmem:[%s231 + $0x70] sm:$0xf] %v1398
        %1527 = vst [vmem:[%s231 + $0x74] sm:$0xf] %v1399
        %1528 = vst [vmem:[%s231 + $0x78] sm:$0xf] %v1400
        %1529 = vst [vmem:[%s231 + $0x7c] sm:$0xf] %v1401
        %1530 = vst [vmem:[%s231 + $0x80] sm:$0xf] %v1402
        %1531 = vst [vmem:[%s231 + $0x84] sm:$0xf] %v1403
        %1532 = vst [vmem:[%s231 + $0x88] sm:$0xf] %v1404
        %1533 = vst [vmem:[%s231 + $0x8c] sm:$0xf] %v1405
        %1534 = vst [vmem:[%s231 + $0x90] sm:$0xf] %v1406
        %1535 = vst [vmem:[%s231 + $0x94] sm:$0xf] %v1407
        %1536 = vst [vmem:[%s231 + $0x98] sm:$0xf] %v1408
        %1537 = vst [vmem:[%s231 + $0x9c] sm:$0xf] %v1409
        %1538 = vst [vmem:[%s231 + $0xa0] sm:$0xf] %v1410
        %1539 = vst [vmem:[%s231 + $0xa4] sm:$0xf] %v1411
        %1540 = vst [vmem:[%s231 + $0xa8] sm:$0xf] %v1412
        %1541 = vst [vmem:[%s231 + $0xac] sm:$0xf] %v1413
        %1542 = vst [vmem:[%s231 + $0xb0] sm:$0xf] %v1414
        %1543 = vst [vmem:[%s231 + $0xb4] sm:$0xf] %v1415
        %1544 = vst [vmem:[%s231 + $0xb8] sm:$0xf] %v1416
        %1545 = vst [vmem:[%s231 + $0xbc] sm:$0xf] %v1417
        %1546 = vst [vmem:[%s231 + $0xc0] sm:$0xf] %v1418
        %1547 = vst [vmem:[%s231 + $0xc4] sm:$0xf] %v1419
        %1548 = vst [vmem:[%s231 + $0xc8] sm:$0xf] %v1420
        %1549 = vst [vmem:[%s231 + $0xcc] sm:$0xf] %v1421
        %1550 = vst [vmem:[%s231 + $0xd0] sm:$0xf] %v1422
        %1551 = vst [vmem:[%s231 + $0xd4] sm:$0xf] %v1423
        %1552 = vst [vmem:[%s231 + $0xd8] sm:$0xf] %v1424
        %1553 = vst [vmem:[%s231 + $0xdc] sm:$0xf] %v1425
        %1554 = vst [vmem:[%s231 + $0xe0] sm:$0xf] %v1426
        %1555 = vst [vmem:[%s231 + $0xe4] sm:$0xf] %v1427
        %1556 = vst [vmem:[%s231 + $0xe8] sm:$0xf] %v1428
        %1557 = vst [vmem:[%s231 + $0xec] sm:$0xf] %v1429
        %1558 = vst [vmem:[%s231 + $0xf0] sm:$0xf] %v1430
        %1559 = vst [vmem:[%s231 + $0xf4] sm:$0xf] %v1431
        %1560 = vst [vmem:[%s231 + $0xf8] sm:$0xf] %v1432
        %1561 = vst [vmem:[%s231 + $0xfc] sm:$0xf] %v1433
        %s1562 = sand.u32 %s119, 1
        %s1563 = scalar_lea.sflag [#allocation4], %s1562
        %s1564 = sand.u32 %s119, 1
        %s1565 = smul.addr %s1564, 256
        %s1566 = scalar_lea.vmem [#allocation7], %s1565
        // Predicated region
        $region45: #{tpu_custom_call.1} parent=35 // pred_check
          %p1567 = pneg %p129
        $region46: #{tpu_custom_call.1} parent=35 // pred_check_branch
          %1569 = sbr.rel (%p1567) target = $region48
        $region47: #{tpu_custom_call.1} parent=35 // pred_region
          %s1570 = smul.u32 64, %s22
          %s1572 = ssub.s32 4096, 4096
          %1573 = vsyncadd %s1563, %s1572
          %s1574 = smul.addr %s1570, 64
          %s1575 = scalar_lea.hbm %s4, %s1574
          %s1576 = sshll.u32 %s1566, 4
          %s1577 = int_to_ptr.vmem [resolvable:$true] %s1576
          %1582 = dma.vmem_to_hbm [thread:$0]  %s1577, 4096, %s1575, %s1563, 64, 64, 4
        $region48: #{tpu_custom_call.1} parent=35 // pred_fallthru
          _
      $region36: #{tpu_custom_call.1} parent=5 // pred_fallthru
        _
      %p1583 = scmp.le.s32.totalorder 2, %s17
      // Predicated region
      $region49: #{tpu_custom_call.1} parent=5 // pred_check
        %p1584 = pneg %p1583
      $region50: #{tpu_custom_call.1} parent=5 // pred_check_branch
        %1586 = sbr.rel (%p1584) target = $region52
      $region51: #{tpu_custom_call.1} parent=5 // pred_region
        %s1587 = ssub.s32 %s17, 2
        // Predicated region
        $region53: #{tpu_custom_call.1} parent=51 // pred_check
          %p1588 = pneg %p135
        $region54: #{tpu_custom_call.1} parent=51 // pred_check_branch
          %1590 = sbr.rel (%p1588) target = $region56
        $region55: #{tpu_custom_call.1} parent=51 // pred_region
          %s1591 = sand.u32 %s120, 1
          %s1592 = scalar_lea.sflag [#allocation4], %s1591
          %s1593 = sand.u32 %s120, 1
          %s1594 = smul.addr %s1593, 256
          %s1595 = scalar_lea.vmem [#allocation7], %s1594
          %1596 = dma.done %s1592, 4096
        $region56: #{tpu_custom_call.1} parent=51 // pred_fallthru
          _
      $region52: #{tpu_custom_call.1} parent=5 // pred_fallthru
        _
    $region6: #{tpu_custom_call.1} parent=1 // loop_footer
      %s21 = sadd.s32 1, %s17
    $region7: #{tpu_custom_call.1} parent=1 // loop_footer_branch
      %16 = sbr.rel target = $region3
    $region8: #{tpu_custom_call.1} parent=1 // loop_exit
      _
    %1597 = vsyncpa [#allocation3], 1
    %s1598 = scalar_lea.sflag [#allocation3], 1
    %1599 = vsyncpa %s1598, 1
    %1600 = vsyncpa [#allocation6], 1
    %1601 = vsyncpa [#allocation4], 1
    %s1602 = scalar_lea.sflag [#allocation4], 1
    %1603 = vsyncpa %s1602, 1

</llo_original>
